<compile_context>
chip_gen: v7x
topology: tpu7x:2x2x1
jax: 0.10.0
libtpu: 0.0.40
codegen_flags: <defaults>
</compile_context>

<pallas_src>
import jax
import jax.numpy as jnp
from jax.experimental import pallas as pl
from jax.experimental.pallas import tpu as pltpu


def dual_mlp_kernel(t_ref, c_ref,
                    w1t_ref, b1t_ref,
                    w1c_ref, b1c_ref,
                    w2t_ref, w2c_ref, b2_ref,
                    w3_ref, b3_ref,
                    out_ref):
    cdt = w1t_ref.dtype  # MXU operand dtype (bf16)

    # Cast activations to the MXU dtype *inside* the kernel so the wrapper
    # never makes an extra HBM pass just for the cast.
    t_in = t_ref[...].astype(cdt)
    c_in = c_ref[...].astype(cdt)

    # Branch 1: title -> Linear + ReLU (Dropout = identity at inference).
    t = jnp.dot(t_in, w1t_ref[...], preferred_element_type=jnp.float32)
    t = jnp.maximum(t + b1t_ref[...], 0.0)

    # Branch 2: content -> Linear + ReLU.
    c = jnp.dot(c_in, w1c_ref[...], preferred_element_type=jnp.float32)
    c = jnp.maximum(c + b1c_ref[...], 0.0)

    # combined = cat([t, c], 1) @ W2 + b2  ==  t @ W2[:H] + c @ W2[H:] + b2
    h = (jnp.dot(t.astype(cdt), w2t_ref[...], preferred_element_type=jnp.float32)
         + jnp.dot(c.astype(cdt), w2c_ref[...], preferred_element_type=jnp.float32)
         + b2_ref[...])
    h = jnp.maximum(h, 0.0)

    # Classifier head (padded to a lane-dense 128-wide output by the wrapper).
    out = jnp.dot(h.astype(cdt), w3_ref[...], preferred_element_type=jnp.float32)
    out_ref[...] = (out + b3_ref[...]).astype(out_ref.dtype)


def _round_up(x, m):
    return ((x + m - 1) // m) * m


def _vmem_budget_cap():
    """Physical-VMEM-aware cap, leaving ~16 MiB headroom for compiler scratch."""
    try:
        phys = int(pltpu.get_tpu_info().vmem_capacity_bytes)
    except Exception:
        phys = 64 << 20                        # conservative: v7x per-TC size
    return max(32 << 20, phys - (16 << 20))    # ~48 MiB on v7x, ~112 MiB on v5e/v6e


def dual_input_mlp(title_emb, content_emb, params, *,
                   block_b=None, compute_dtype=jnp.bfloat16):
    """params: dict of (in, out)-layout weights and (1, out) f32 biases."""
    B, input_dim = title_emb.shape
    hidden_dim = params["w1t"].shape[1]
    num_classes = params["w3"].shape[1]

    vmem_cap = _vmem_budget_cap()
    if block_b is None:
        # Bigger tiles on 128-MiB-VMEM parts (v5e/v6e); 512 is v7x-safe.
        block_b = 1024 if vmem_cap >= (96 << 20) else 512

    # --- pad classifier head to a lane-dense (>=128) output width; no wider
    #     (head is ~1% of FLOPs, extra padding is pure store traffic). --------
    nc_pad = _round_up(max(num_classes, 128), 128)
    w3_p = jnp.zeros((hidden_dim, nc_pad), jnp.float32).at[:, :num_classes].set(params["w3"])
    b3_p = jnp.zeros((1, nc_pad), jnp.float32).at[:, :num_classes].set(params["b3"])

    # --- batch tiling: no padded activation copies. A ragged last tile is
    #     handled by Pallas boundary-block masking (OOB rows produce garbage
    #     that is never stored); even step count keeps both v7x TCs busy. -----
    sub = 16 if compute_dtype == jnp.bfloat16 else 8
    if B <= max(block_b, sub):
        tb = B                                   # single full-extent tile
    else:
        nsteps = pl.cdiv(B, block_b)
        if nsteps % 2:
            nsteps += 1                          # even grid for megacore split
        tb = _round_up(pl.cdiv(B, nsteps), sub)
    grid = (pl.cdiv(B, tb),)

    # --- weights -> bf16 once (small, reused across the whole batch);
    #     biases stay f32 and are added to the f32 accumulators. --------------
    cast = lambda x: x.astype(compute_dtype)
    w1t, w1c = cast(params["w1t"]), cast(params["w1c"])
    w2t, w2c = cast(params["w2t"]), cast(params["w2c"])
    w3c = cast(w3_p)
    b1t, b1c, b2, b3 = params["b1t"], params["b1c"], params["b2"], b3_p
    weights = (w1t, b1t, w1c, b1c, w2t, w2c, b2, w3c, b3)

    act_spec = pl.BlockSpec((tb, input_dim), lambda i: (i, 0))
    out_spec = pl.BlockSpec((tb, nc_pad), lambda i: (i, 0))
    out_shape = jax.ShapeDtypeStruct((B, nc_pad), jnp.float32)

    bytes_of = lambda a: a.size * a.dtype.itemsize
    weight_bytes = sum(bytes_of(a) for a in weights)
    act_bytes = 2 * 2 * tb * input_dim * title_emb.dtype.itemsize  # 2 inputs, double-buffered
    out_bytes = 2 * tb * nc_pad * 4                                # double-buffered f32 out
    scratch_bytes = 4 * tb * max(hidden_dim, nc_pad) * 4           # f32 intermediates

    def run(single_buffer_weights):
        if single_buffer_weights:
            # Constant index_map => never re-fetched; one buffer is enough.
            resident = lambda a: pl.BlockSpec(a.shape, lambda i: (0, 0),
                                              pipeline_mode=pl.Buffered(1))
            w_bufs = 1
        else:
            resident = lambda a: pl.BlockSpec(a.shape, lambda i: (0, 0))
            w_bufs = 2
        vmem_limit = int(1.25 * (w_bufs * weight_bytes + act_bytes
                                 + out_bytes + scratch_bytes))
        vmem_limit = min(max(vmem_limit, 32 << 20), vmem_cap)
        return pl.pallas_call(
            dual_mlp_kernel,
            out_shape=out_shape,
            grid=grid,
            in_specs=[act_spec, act_spec] + [resident(a) for a in weights],
            out_specs=out_spec,
            compiler_params=pltpu.CompilerParams(
                dimension_semantics=("parallel",),   # megacore sharding on v7x
                vmem_limit_bytes=vmem_limit,
            ),
        )(title_emb, content_emb, *weights)

    try:
        out_padded = run(single_buffer_weights=True)
        jax.block_until_ready(out_padded)   # surface lowering/runtime errors here
    except Exception:
        # pl.Buffered(1) not accepted on this jax version -> default buffering.
        out_padded = run(single_buffer_weights=False)

    return out_padded[:, :num_classes]


def init_params(key, input_dim, hidden_dim, num_classes):
    """Deterministic synthetic init (PyTorch-style uniform fan-in scaling)."""
    ks = jax.random.split(key, 8)

    def lin(kw, kb, fan_in, fan_out):
        bound = 1.0 / jnp.sqrt(fan_in)
        w = jax.random.uniform(kw, (fan_in, fan_out), jnp.float32, -bound, bound)
        b = jax.random.uniform(kb, (1, fan_out), jnp.float32, -bound, bound)
        return w, b

    w1t, b1t = lin(ks[0], ks[1], input_dim, hidden_dim)
    w1c, b1c = lin(ks[2], ks[3], input_dim, hidden_dim)
    # combined first Linear: (hidden*2 -> hidden); split into title/content halves.
    w2, b2 = lin(ks[4], ks[5], 2 * hidden_dim, hidden_dim)
    w2t, w2c = w2[:hidden_dim, :], w2[hidden_dim:, :]
    w3, b3 = lin(ks[6], ks[7], hidden_dim, num_classes)

    return dict(w1t=w1t, b1t=b1t, w1c=w1c, b1c=b1c,
                w2t=w2t, w2c=w2c, b2=b2, w3=w3, b3=b3)


def reference_forward(title_emb, content_emb, p, compute_dtype=jnp.bfloat16):
    """Pure-JAX reference with the same bf16-operand / f32-accumulate recipe."""
    cast = lambda x: x.astype(compute_dtype)
    dot = lambda a, b: jnp.dot(cast(a), cast(b), preferred_element_type=jnp.float32)
    t = jnp.maximum(dot(title_emb, p["w1t"]) + p["b1t"], 0.0)
    c = jnp.maximum(dot(content_emb, p["w1c"]) + p["b1c"], 0.0)
    h = jnp.maximum(dot(t, p["w2t"]) + dot(c, p["w2c"]) + p["b2"], 0.0)
    return dot(h, p["w3"]) + p["b3"]


if __name__ == "__main__":
    # Small shapes consistent with the module (input_dim=2560, hidden=512,
    # num_classes=1 in the original; scaled down for the example).
    batch, input_dim, hidden_dim, num_classes = 8, 256, 128, 1

    key = jax.random.PRNGKey(0)
    k_params, k_t, k_c = jax.random.split(key, 3)

    params = init_params(k_params, input_dim, hidden_dim, num_classes)
    title_emb = jax.random.normal(k_t, (batch, input_dim), jnp.float32)
    content_emb = jax.random.normal(k_c, (batch, input_dim), jnp.float32)

    out = dual_input_mlp(title_emb, content_emb, params)
    out = jax.block_until_ready(out)

    ref = reference_forward(title_emb, content_emb, params)
    assert out.shape == (batch, num_classes)
    assert jnp.allclose(out, ref, atol=1e-2, rtol=1e-2), "mismatch vs reference"

    print("KERNEL_OK")
</pallas_src>

<mosaic_0001>
module attributes {stable_mosaic.version = 11 : i64} {
  func.func @dual_mlp_kernel(%arg0: i32, %arg1: memref<8x256xf32, #tpu.memory_space<vmem>>, %arg2: memref<8x256xf32, #tpu.memory_space<vmem>>, %arg3: memref<256x128xbf16, #tpu.memory_space<vmem>>, %arg4: memref<1x128xf32, #tpu.memory_space<vmem>>, %arg5: memref<256x128xbf16, #tpu.memory_space<vmem>>, %arg6: memref<1x128xf32, #tpu.memory_space<vmem>>, %arg7: memref<128x128xbf16, #tpu.memory_space<vmem>>, %arg8: memref<128x128xbf16, #tpu.memory_space<vmem>>, %arg9: memref<1x128xf32, #tpu.memory_space<vmem>>, %arg10: memref<128x128xbf16, #tpu.memory_space<vmem>>, %arg11: memref<1x128xf32, #tpu.memory_space<vmem>>, %arg12: memref<8x128xf32, #tpu.memory_space<vmem>>) attributes {dimension_semantics = [#tpu.dimension_semantics<parallel>], iteration_bounds = array<i64: 1>, scalar_prefetch = 0 : i64, scratch_operands = 0 : i64, tpu.core_type = #tpu.core_type<tc>, window_params = [{transform_indices = @transform_0, window_bounds = array<i64: 8, 256>}, {transform_indices = @transform_1, window_bounds = array<i64: 8, 256>}, {pipeline_mode = #tpu.pipeline_mode<synchronous>, transform_indices = @transform_2, window_bounds = array<i64: 256, 128>}, {pipeline_mode = #tpu.pipeline_mode<synchronous>, transform_indices = @transform_3, window_bounds = array<i64: 1, 128>}, {pipeline_mode = #tpu.pipeline_mode<synchronous>, transform_indices = @transform_4, window_bounds = array<i64: 256, 128>}, {pipeline_mode = #tpu.pipeline_mode<synchronous>, transform_indices = @transform_5, window_bounds = array<i64: 1, 128>}, {pipeline_mode = #tpu.pipeline_mode<synchronous>, transform_indices = @transform_6, window_bounds = array<i64: 128, 128>}, {pipeline_mode = #tpu.pipeline_mode<synchronous>, transform_indices = @transform_7, window_bounds = array<i64: 128, 128>}, {pipeline_mode = #tpu.pipeline_mode<synchronous>, transform_indices = @transform_8, window_bounds = array<i64: 1, 128>}, {pipeline_mode = #tpu.pipeline_mode<synchronous>, transform_indices = @transform_9, window_bounds = array<i64: 128, 128>}, {pipeline_mode = #tpu.pipeline_mode<synchronous>, transform_indices = @transform_10, window_bounds = array<i64: 1, 128>}, {transform_indices = @transform_11, window_bounds = array<i64: 8, 128>}]} {
    %c0 = arith.constant 0 : index
    %c0_0 = arith.constant 0 : index
    %0 = vector.load %arg1[%c0, %c0_0] : memref<8x256xf32, #tpu.memory_space<vmem>>, vector<8x256xf32>
    %1 = arith.truncf %0 : vector<8x256xf32> to vector<8x256xbf16>
    %c0_1 = arith.constant 0 : index
    %c0_2 = arith.constant 0 : index
    %2 = vector.load %arg2[%c0_1, %c0_2] : memref<8x256xf32, #tpu.memory_space<vmem>>, vector<8x256xf32>
    %3 = arith.truncf %2 : vector<8x256xf32> to vector<8x256xbf16>
    %c0_3 = arith.constant 0 : index
    %c0_4 = arith.constant 0 : index
    %4 = vector.load %arg3[%c0_3, %c0_4] : memref<256x128xbf16, #tpu.memory_space<vmem>>, vector<256x128xbf16>
    %cst = arith.constant dense<0.000000e+00> : vector<8x128xf32>
    %5 = tpu.matmul %1, %4, %cst {dimension_numbers = #tpu.dot_dimension_numbers<[1], [0], [0], [1], [0, 0, 1, 1], [], []>} : vector<8x256xbf16>, vector<256x128xbf16>, vector<8x128xf32> -> vector<8x128xf32>
    %c0_5 = arith.constant 0 : index
    %c0_6 = arith.constant 0 : index
    %6 = vector.load %arg4[%c0_5, %c0_6] : memref<1x128xf32, #tpu.memory_space<vmem>>, vector<1x128xf32>
    %7 = vector.broadcast %6 : vector<1x128xf32> to vector<8x128xf32>
    %8 = arith.addf %5, %7 : vector<8x128xf32>
    %cst_7 = arith.constant 0.000000e+00 : f32
    %9 = vector.broadcast %cst_7 : f32 to vector<8x128xf32>
    %10 = arith.maximumf %8, %9 : vector<8x128xf32>
    %c0_8 = arith.constant 0 : index
    %c0_9 = arith.constant 0 : index
    %11 = vector.load %arg5[%c0_8, %c0_9] : memref<256x128xbf16, #tpu.memory_space<vmem>>, vector<256x128xbf16>
    %cst_10 = arith.constant dense<0.000000e+00> : vector<8x128xf32>
    %12 = tpu.matmul %3, %11, %cst_10 {dimension_numbers = #tpu.dot_dimension_numbers<[1], [0], [0], [1], [0, 0, 1, 1], [], []>} : vector<8x256xbf16>, vector<256x128xbf16>, vector<8x128xf32> -> vector<8x128xf32>
    %c0_11 = arith.constant 0 : index
    %c0_12 = arith.constant 0 : index
    %13 = vector.load %arg6[%c0_11, %c0_12] : memref<1x128xf32, #tpu.memory_space<vmem>>, vector<1x128xf32>
    %14 = vector.broadcast %13 : vector<1x128xf32> to vector<8x128xf32>
    %15 = arith.addf %12, %14 : vector<8x128xf32>
    %cst_13 = arith.constant 0.000000e+00 : f32
    %16 = vector.broadcast %cst_13 : f32 to vector<8x128xf32>
    %17 = arith.maximumf %15, %16 : vector<8x128xf32>
    %18 = arith.truncf %10 : vector<8x128xf32> to vector<8x128xbf16>
    %c0_14 = arith.constant 0 : index
    %c0_15 = arith.constant 0 : index
    %19 = vector.load %arg7[%c0_14, %c0_15] : memref<128x128xbf16, #tpu.memory_space<vmem>>, vector<128x128xbf16>
    %cst_16 = arith.constant dense<0.000000e+00> : vector<8x128xf32>
    %20 = tpu.matmul %18, %19, %cst_16 {dimension_numbers = #tpu.dot_dimension_numbers<[1], [0], [0], [1], [0, 0, 1, 1], [], []>} : vector<8x128xbf16>, vector<128x128xbf16>, vector<8x128xf32> -> vector<8x128xf32>
    %21 = arith.truncf %17 : vector<8x128xf32> to vector<8x128xbf16>
    %c0_17 = arith.constant 0 : index
    %c0_18 = arith.constant 0 : index
    %22 = vector.load %arg8[%c0_17, %c0_18] : memref<128x128xbf16, #tpu.memory_space<vmem>>, vector<128x128xbf16>
    %cst_19 = arith.constant dense<0.000000e+00> : vector<8x128xf32>
    %23 = tpu.matmul %21, %22, %cst_19 {dimension_numbers = #tpu.dot_dimension_numbers<[1], [0], [0], [1], [0, 0, 1, 1], [], []>} : vector<8x128xbf16>, vector<128x128xbf16>, vector<8x128xf32> -> vector<8x128xf32>
    %24 = arith.addf %20, %23 : vector<8x128xf32>
    %c0_20 = arith.constant 0 : index
    %c0_21 = arith.constant 0 : index
    %25 = vector.load %arg9[%c0_20, %c0_21] : memref<1x128xf32, #tpu.memory_space<vmem>>, vector<1x128xf32>
    %26 = vector.broadcast %25 : vector<1x128xf32> to vector<8x128xf32>
    %27 = arith.addf %24, %26 : vector<8x128xf32>
    %cst_22 = arith.constant 0.000000e+00 : f32
    %28 = vector.broadcast %cst_22 : f32 to vector<8x128xf32>
    %29 = arith.maximumf %27, %28 : vector<8x128xf32>
    %30 = arith.truncf %29 : vector<8x128xf32> to vector<8x128xbf16>
    %c0_23 = arith.constant 0 : index
    %c0_24 = arith.constant 0 : index
    %31 = vector.load %arg10[%c0_23, %c0_24] : memref<128x128xbf16, #tpu.memory_space<vmem>>, vector<128x128xbf16>
    %cst_25 = arith.constant dense<0.000000e+00> : vector<8x128xf32>
    %32 = tpu.matmul %30, %31, %cst_25 {dimension_numbers = #tpu.dot_dimension_numbers<[1], [0], [0], [1], [0, 0, 1, 1], [], []>} : vector<8x128xbf16>, vector<128x128xbf16>, vector<8x128xf32> -> vector<8x128xf32>
    %c0_26 = arith.constant 0 : index
    %c0_27 = arith.constant 0 : index
    %33 = vector.load %arg11[%c0_26, %c0_27] : memref<1x128xf32, #tpu.memory_space<vmem>>, vector<1x128xf32>
    %34 = vector.broadcast %33 : vector<1x128xf32> to vector<8x128xf32>
    %35 = arith.addf %32, %34 : vector<8x128xf32>
    %c0_28 = arith.constant 0 : index
    %c0_29 = arith.constant 0 : index
    %36 = vector.load %arg12[%c0_28, %c0_29] : memref<8x128xf32, #tpu.memory_space<vmem>>, vector<8x128xf32>
    tpu.vector_store %arg12[%c0_28, %c0_29], %35 {strides = array<i32>} : memref<8x128xf32, #tpu.memory_space<vmem>>, vector<8x128xf32>,
    return
  }
  func.func @transform_0(%arg0: i32) -> (i32, i32) {
    %c0_i32 = arith.constant 0 : i32
    %c0_i32_0 = arith.constant 0 : i32
    return %arg0, %c0_i32 : i32, i32
  }
  func.func @transform_1(%arg0: i32) -> (i32, i32) {
    %c0_i32 = arith.constant 0 : i32
    %c0_i32_0 = arith.constant 0 : i32
    return %arg0, %c0_i32 : i32, i32
  }
  func.func @transform_2(%arg0: i32) -> (i32, i32) {
    %c0_i32 = arith.constant 0 : i32
    %c0_i32_0 = arith.constant 0 : i32
    %c0_i32_1 = arith.constant 0 : i32
    return %c0_i32, %c0_i32_0 : i32, i32
  }
  func.func @transform_3(%arg0: i32) -> (i32, i32) {
    %c0_i32 = arith.constant 0 : i32
    %c0_i32_0 = arith.constant 0 : i32
    %c0_i32_1 = arith.constant 0 : i32
    return %c0_i32, %c0_i32_0 : i32, i32
  }
  func.func @transform_4(%arg0: i32) -> (i32, i32) {
    %c0_i32 = arith.constant 0 : i32
    %c0_i32_0 = arith.constant 0 : i32
    %c0_i32_1 = arith.constant 0 : i32
    return %c0_i32, %c0_i32_0 : i32, i32
  }
  func.func @transform_5(%arg0: i32) -> (i32, i32) {
    %c0_i32 = arith.constant 0 : i32
    %c0_i32_0 = arith.constant 0 : i32
    %c0_i32_1 = arith.constant 0 : i32
    return %c0_i32, %c0_i32_0 : i32, i32
  }
  func.func @transform_6(%arg0: i32) -> (i32, i32) {
    %c0_i32 = arith.constant 0 : i32
    %c0_i32_0 = arith.constant 0 : i32
    %c0_i32_1 = arith.constant 0 : i32
    return %c0_i32, %c0_i32_0 : i32, i32
  }
  func.func @transform_7(%arg0: i32) -> (i32, i32) {
    %c0_i32 = arith.constant 0 : i32
    %c0_i32_0 = arith.constant 0 : i32
    %c0_i32_1 = arith.constant 0 : i32
    return %c0_i32, %c0_i32_0 : i32, i32
  }
  func.func @transform_8(%arg0: i32) -> (i32, i32) {
    %c0_i32 = arith.constant 0 : i32
    %c0_i32_0 = arith.constant 0 : i32
    %c0_i32_1 = arith.constant 0 : i32
    return %c0_i32, %c0_i32_0 : i32, i32
  }
  func.func @transform_9(%arg0: i32) -> (i32, i32) {
    %c0_i32 = arith.constant 0 : i32
    %c0_i32_0 = arith.constant 0 : i32
    %c0_i32_1 = arith.constant 0 : i32
    return %c0_i32, %c0_i32_0 : i32, i32
  }
  func.func @transform_10(%arg0: i32) -> (i32, i32) {
    %c0_i32 = arith.constant 0 : i32
    %c0_i32_0 = arith.constant 0 : i32
    %c0_i32_1 = arith.constant 0 : i32
    return %c0_i32, %c0_i32_0 : i32, i32
  }
  func.func @transform_11(%arg0: i32) -> (i32, i32) {
    %c0_i32 = arith.constant 0 : i32
    %c0_i32_0 = arith.constant 0 : i32
    return %arg0, %c0_i32 : i32, i32
  }
}

module attributes {stable_mosaic.version = 11 : i64} {
  func.func @dual_mlp_kernel(%arg0: i32, %arg1: memref<8x256xf32, #tpu.memory_space<vmem>>, %arg2: memref<8x256xf32, #tpu.memory_space<vmem>>, %arg3: memref<256x128xbf16, #tpu.memory_space<vmem>>, %arg4: memref<1x128xf32, #tpu.memory_space<vmem>>, %arg5: memref<256x128xbf16, #tpu.memory_space<vmem>>, %arg6: memref<1x128xf32, #tpu.memory_space<vmem>>, %arg7: memref<128x128xbf16, #tpu.memory_space<vmem>>, %arg8: memref<128x128xbf16, #tpu.memory_space<vmem>>, %arg9: memref<1x128xf32, #tpu.memory_space<vmem>>, %arg10: memref<128x128xbf16, #tpu.memory_space<vmem>>, %arg11: memref<1x128xf32, #tpu.memory_space<vmem>>, %arg12: memref<8x128xf32, #tpu.memory_space<vmem>>) attributes {dimension_semantics = [#tpu.dimension_semantics<parallel>], iteration_bounds = array<i64: 1>, scalar_prefetch = 0 : i64, scratch_operands = 0 : i64, tpu.core_type = #tpu.core_type<tc>, window_params = [{transform_indices = @transform_0, window_bounds = array<i64: 8, 256>}, {transform_indices = @transform_1, window_bounds = array<i64: 8, 256>}, {pipeline_mode = #tpu.pipeline_mode<synchronous>, transform_indices = @transform_2, window_bounds = array<i64: 256, 128>}, {pipeline_mode = #tpu.pipeline_mode<synchronous>, transform_indices = @transform_3, window_bounds = array<i64: 1, 128>}, {pipeline_mode = #tpu.pipeline_mode<synchronous>, transform_indices = @transform_4, window_bounds = array<i64: 256, 128>}, {pipeline_mode = #tpu.pipeline_mode<synchronous>, transform_indices = @transform_5, window_bounds = array<i64: 1, 128>}, {pipeline_mode = #tpu.pipeline_mode<synchronous>, transform_indices = @transform_6, window_bounds = array<i64: 128, 128>}, {pipeline_mode = #tpu.pipeline_mode<synchronous>, transform_indices = @transform_7, window_bounds = array<i64: 128, 128>}, {pipeline_mode = #tpu.pipeline_mode<synchronous>, transform_indices = @transform_8, window_bounds = array<i64: 1, 128>}, {pipeline_mode = #tpu.pipeline_mode<synchronous>, transform_indices = @transform_9, window_bounds = array<i64: 128, 128>}, {pipeline_mode = #tpu.pipeline_mode<synchronous>, transform_indices = @transform_10, window_bounds = array<i64: 1, 128>}, {transform_indices = @transform_11, window_bounds = array<i64: 8, 128>}]} {
    %c0 = arith.constant 0 : index
    %c0_0 = arith.constant 0 : index
    %0 = vector.load %arg1[%c0, %c0_0] : memref<8x256xf32, #tpu.memory_space<vmem>>, vector<8x256xf32>
    %1 = arith.truncf %0 : vector<8x256xf32> to vector<8x256xbf16>
    %c0_1 = arith.constant 0 : index
    %c0_2 = arith.constant 0 : index
    %2 = vector.load %arg2[%c0_1, %c0_2] : memref<8x256xf32, #tpu.memory_space<vmem>>, vector<8x256xf32>
    %3 = arith.truncf %2 : vector<8x256xf32> to vector<8x256xbf16>
    %c0_3 = arith.constant 0 : index
    %c0_4 = arith.constant 0 : index
    %4 = vector.load %arg3[%c0_3, %c0_4] : memref<256x128xbf16, #tpu.memory_space<vmem>>, vector<256x128xbf16>
    %cst = arith.constant dense<0.000000e+00> : vector<8x128xf32>
    %5 = tpu.matmul %1, %4, %cst {dimension_numbers = #tpu.dot_dimension_numbers<[1], [0], [0], [1], [0, 0, 1, 1], [], []>} : vector<8x256xbf16>, vector<256x128xbf16>, vector<8x128xf32> -> vector<8x128xf32>
    %c0_5 = arith.constant 0 : index
    %c0_6 = arith.constant 0 : index
    %6 = vector.load %arg4[%c0_5, %c0_6] : memref<1x128xf32, #tpu.memory_space<vmem>>, vector<1x128xf32>
    %7 = vector.broadcast %6 : vector<1x128xf32> to vector<8x128xf32>
    %8 = arith.addf %5, %7 : vector<8x128xf32>
    %cst_7 = arith.constant 0.000000e+00 : f32
    %9 = vector.broadcast %cst_7 : f32 to vector<8x128xf32>
    %10 = arith.maximumf %8, %9 : vector<8x128xf32>
    %c0_8 = arith.constant 0 : index
    %c0_9 = arith.constant 0 : index
    %11 = vector.load %arg5[%c0_8, %c0_9] : memref<256x128xbf16, #tpu.memory_space<vmem>>, vector<256x128xbf16>
    %cst_10 = arith.constant dense<0.000000e+00> : vector<8x128xf32>
    %12 = tpu.matmul %3, %11, %cst_10 {dimension_numbers = #tpu.dot_dimension_numbers<[1], [0], [0], [1], [0, 0, 1, 1], [], []>} : vector<8x256xbf16>, vector<256x128xbf16>, vector<8x128xf32> -> vector<8x128xf32>
    %c0_11 = arith.constant 0 : index
    %c0_12 = arith.constant 0 : index
    %13 = vector.load %arg6[%c0_11, %c0_12] : memref<1x128xf32, #tpu.memory_space<vmem>>, vector<1x128xf32>
    %14 = vector.broadcast %13 : vector<1x128xf32> to vector<8x128xf32>
    %15 = arith.addf %12, %14 : vector<8x128xf32>
    %cst_13 = arith.constant 0.000000e+00 : f32
    %16 = vector.broadcast %cst_13 : f32 to vector<8x128xf32>
    %17 = arith.maximumf %15, %16 : vector<8x128xf32>
    %18 = arith.truncf %10 : vector<8x128xf32> to vector<8x128xbf16>
    %c0_14 = arith.constant 0 : index
    %c0_15 = arith.constant 0 : index
    %19 = vector.load %arg7[%c0_14, %c0_15] : memref<128x128xbf16, #tpu.memory_space<vmem>>, vector<128x128xbf16>
    %cst_16 = arith.constant dense<0.000000e+00> : vector<8x128xf32>
    %20 = tpu.matmul %18, %19, %cst_16 {dimension_numbers = #tpu.dot_dimension_numbers<[1], [0], [0], [1], [0, 0, 1, 1], [], []>} : vector<8x128xbf16>, vector<128x128xbf16>, vector<8x128xf32> -> vector<8x128xf32>
    %21 = arith.truncf %17 : vector<8x128xf32> to vector<8x128xbf16>
    %c0_17 = arith.constant 0 : index
    %c0_18 = arith.constant 0 : index
    %22 = vector.load %arg8[%c0_17, %c0_18] : memref<128x128xbf16, #tpu.memory_space<vmem>>, vector<128x128xbf16>
    %cst_19 = arith.constant dense<0.000000e+00> : vector<8x128xf32>
    %23 = tpu.matmul %21, %22, %cst_19 {dimension_numbers = #tpu.dot_dimension_numbers<[1], [0], [0], [1], [0, 0, 1, 1], [], []>} : vector<8x128xbf16>, vector<128x128xbf16>, vector<8x128xf32> -> vector<8x128xf32>
    %24 = arith.addf %20, %23 : vector<8x128xf32>
    %c0_20 = arith.constant 0 : index
    %c0_21 = arith.constant 0 : index
    %25 = vector.load %arg9[%c0_20, %c0_21] : memref<1x128xf32, #tpu.memory_space<vmem>>, vector<1x128xf32>
    %26 = vector.broadcast %25 : vector<1x128xf32> to vector<8x128xf32>
    %27 = arith.addf %24, %26 : vector<8x128xf32>
    %cst_22 = arith.constant 0.000000e+00 : f32
    %28 = vector.broadcast %cst_22 : f32 to vector<8x128xf32>
    %29 = arith.maximumf %27, %28 : vector<8x128xf32>
    %30 = arith.truncf %29 : vector<8x128xf32> to vector<8x128xbf16>
    %c0_23 = arith.constant 0 : index
    %c0_24 = arith.constant 0 : index
    %31 = vector.load %arg10[%c0_23, %c0_24] : memref<128x128xbf16, #tpu.memory_space<vmem>>, vector<128x128xbf16>
    %cst_25 = arith.constant dense<0.000000e+00> : vector<8x128xf32>
    %32 = tpu.matmul %30, %31, %cst_25 {dimension_numbers = #tpu.dot_dimension_numbers<[1], [0], [0], [1], [0, 0, 1, 1], [], []>} : vector<8x128xbf16>, vector<128x128xbf16>, vector<8x128xf32> -> vector<8x128xf32>
    %c0_26 = arith.constant 0 : index
    %c0_27 = arith.constant 0 : index
    %33 = vector.load %arg11[%c0_26, %c0_27] : memref<1x128xf32, #tpu.memory_space<vmem>>, vector<1x128xf32>
    %34 = vector.broadcast %33 : vector<1x128xf32> to vector<8x128xf32>
    %35 = arith.addf %32, %34 : vector<8x128xf32>
    %c0_28 = arith.constant 0 : index
    %c0_29 = arith.constant 0 : index
    %36 = vector.load %arg12[%c0_28, %c0_29] : memref<8x128xf32, #tpu.memory_space<vmem>>, vector<8x128xf32>
    tpu.vector_store %arg12[%c0_28, %c0_29], %35 {strides = array<i32>} : memref<8x128xf32, #tpu.memory_space<vmem>>, vector<8x128xf32>,
    return
  }
  func.func @transform_0(%arg0: i32) -> (i32, i32) {
    %c0_i32 = arith.constant 0 : i32
    %c0_i32_0 = arith.constant 0 : i32
    return %arg0, %c0_i32 : i32, i32
  }
  func.func @transform_1(%arg0: i32) -> (i32, i32) {
    %c0_i32 = arith.constant 0 : i32
    %c0_i32_0 = arith.constant 0 : i32
    return %arg0, %c0_i32 : i32, i32
  }
  func.func @transform_2(%arg0: i32) -> (i32, i32) {
    %c0_i32 = arith.constant 0 : i32
    %c0_i32_0 = arith.constant 0 : i32
    %c0_i32_1 = arith.constant 0 : i32
    return %c0_i32, %c0_i32_0 : i32, i32
  }
  func.func @transform_3(%arg0: i32) -> (i32, i32) {
    %c0_i32 = arith.constant 0 : i32
    %c0_i32_0 = arith.constant 0 : i32
    %c0_i32_1 = arith.constant 0 : i32
    return %c0_i32, %c0_i32_0 : i32, i32
  }
  func.func @transform_4(%arg0: i32) -> (i32, i32) {
    %c0_i32 = arith.constant 0 : i32
    %c0_i32_0 = arith.constant 0 : i32
    %c0_i32_1 = arith.constant 0 : i32
    return %c0_i32, %c0_i32_0 : i32, i32
  }
  func.func @transform_5(%arg0: i32) -> (i32, i32) {
    %c0_i32 = arith.constant 0 : i32
    %c0_i32_0 = arith.constant 0 : i32
    %c0_i32_1 = arith.constant 0 : i32
    return %c0_i32, %c0_i32_0 : i32, i32
  }
  func.func @transform_6(%arg0: i32) -> (i32, i32) {
    %c0_i32 = arith.constant 0 : i32
    %c0_i32_0 = arith.constant 0 : i32
    %c0_i32_1 = arith.constant 0 : i32
    return %c0_i32, %c0_i32_0 : i32, i32
  }
  func.func @transform_7(%arg0: i32) -> (i32, i32) {
    %c0_i32 = arith.constant 0 : i32
    %c0_i32_0 = arith.constant 0 : i32
    %c0_i32_1 = arith.constant 0 : i32
    return %c0_i32, %c0_i32_0 : i32, i32
  }
  func.func @transform_8(%arg0: i32) -> (i32, i32) {
    %c0_i32 = arith.constant 0 : i32
    %c0_i32_0 = arith.constant 0 : i32
    %c0_i32_1 = arith.constant 0 : i32
    return %c0_i32, %c0_i32_0 : i32, i32
  }
  func.func @transform_9(%arg0: i32) -> (i32, i32) {
    %c0_i32 = arith.constant 0 : i32
    %c0_i32_0 = arith.constant 0 : i32
    %c0_i32_1 = arith.constant 0 : i32
    return %c0_i32, %c0_i32_0 : i32, i32
  }
  func.func @transform_10(%arg0: i32) -> (i32, i32) {
    %c0_i32 = arith.constant 0 : i32
    %c0_i32_0 = arith.constant 0 : i32
    %c0_i32_1 = arith.constant 0 : i32
    return %c0_i32, %c0_i32_0 : i32, i32
  }
  func.func @transform_11(%arg0: i32) -> (i32, i32) {
    %c0_i32 = arith.constant 0 : i32
    %c0_i32_0 = arith.constant 0 : i32
    return %arg0, %c0_i32 : i32, i32
  }
}

</mosaic_0001>

<llo_original>
// kernel: tpu_custom_call.1
$region0: #{tpu_custom_call.1}
  #allocation0 [shape = 'u32[]', space=smem, size = 0x4, offset = 0x4, fixed_abs, tag = 'smem constant byte address 0x4 - core index']
  #allocation1 [shape = 'u32[144,128]{1,0:T(1,128)}', space=vmem, size = 0x12000, scoped, tag = 'internal scratch']
  %s0 = inlined_call_operand.hbm [shape: f32[8,256], index: 0, kind: input, shape index: {}]
  %s1 = inlined_call_operand.hbm [shape: f32[8,256], index: 1, kind: input, shape index: {}]
  %s2 = inlined_call_operand.hbm [shape: bf16[256,128], index: 2, kind: input, shape index: {}]
  %s3 = inlined_call_operand.vmem [shape: f32[1,128], index: 3, kind: input, shape index: {}]
  %s4 = inlined_call_operand.hbm [shape: bf16[256,128], index: 4, kind: input, shape index: {}]
  %s5 = inlined_call_operand.vmem [shape: f32[1,128], index: 5, kind: input, shape index: {}]
  %s6 = inlined_call_operand.hbm [shape: bf16[128,128], index: 6, kind: input, shape index: {}]
  %s7 = inlined_call_operand.hbm [shape: bf16[128,128], index: 7, kind: input, shape index: {}]
  %s8 = inlined_call_operand.vmem [shape: f32[1,128], index: 8, kind: input, shape index: {}]
  %s9 = inlined_call_operand.hbm [shape: bf16[128,128], index: 9, kind: input, shape index: {}]
  %s10 = inlined_call_operand.vmem [shape: f32[1,128], index: 10, kind: input, shape index: {}]
  %s11 = inlined_call_operand.hbm [shape: f32[8,128], index: 11, kind: output, shape index: {}]
  %s12 = sld [smem:[#allocation0]]
  $region82: #{tpu_custom_call.1} parent=0
    _
  %s14 = ssub.s32 1, %s12
  %s15 = scalar_select 0, %s14, %s12
  $region1: #{tpu_custom_call.1} parent=0
    #allocation2 [shape = 'u8[8192]{0}', space=vmem, size = 0x2000, scoped, tag = 'input window, operand 0, single buffered']
    #allocation3 [shape = 's32[1]{0}', space=sflag, size = 0x4, scoped, tag = 'scoped memory for tpu_custom_call.1']
    #allocation4 [shape = 's32[1]{0}', space=sflag, size = 0x4, scoped, tag = 'scoped memory for tpu_custom_call.1']
    #allocation5 [shape = 'u8[8192]{0}', space=vmem, size = 0x2000, scoped, tag = 'input window, operand 1, single buffered']
    #allocation6 [shape = 's32[1]{0}', space=sflag, size = 0x4, scoped, tag = 'scoped memory for tpu_custom_call.1']
    #allocation7 [shape = 'u8[65536]{0}', space=vmem, size = 0x10000, scoped, tag = 'input window, operand 2, single buffered']
    #allocation8 [shape = 'u8[65536]{0}', space=vmem, size = 0x10000, scoped, tag = 'input window, operand 4, single buffered']
    #allocation9 [shape = 's32[1]{0}', space=sflag, size = 0x4, scoped, tag = 'scoped memory for tpu_custom_call.1']
    #allocation10 [shape = 'u8[32768]{0}', space=vmem, size = 0x8000, scoped, tag = 'input window, operand 6, single buffered']
    #allocation11 [shape = 'u8[32768]{0}', space=vmem, size = 0x8000, scoped, tag = 'input window, operand 7, single buffered']
    #allocation12 [shape = 's32[1]{0}', space=sflag, size = 0x4, scoped, tag = 'scoped memory for tpu_custom_call.1']
    #allocation13 [shape = 'u8[32768]{0}', space=vmem, size = 0x8000, scoped, tag = 'input window, operand 9, single buffered']
    #allocation14 [shape = 'u8[4096]{0}', space=vmem, size = 0x1000, scoped, tag = 'output window, operand 0, single buffered']
    %16 = vsyncpa [#allocation3], 0
    %17 = vsyncpa [#allocation6], 0
    %18 = vsyncpa [#allocation9], 0
    %19 = vsyncpa [#allocation12], 0
    %20 = vsyncpa [#allocation4], 0
    // Predicated region
    $region2: #{tpu_custom_call.1} parent=1 // pred_check
      _
    $region3: #{tpu_custom_call.1} parent=1 // pred_check_branch
      %22 = sbr.rel (0) target = $region5
    $region4: #{tpu_custom_call.1} parent=1 // pred_region
      %s24 = ssub.s32 256, 256
      %25 = vsyncadd [#allocation3], %s24
      %s27 = sshll.u32 [#allocation2], 4
      %s28 = int_to_ptr.vmem [resolvable:$true] %s27
      %30 = dma.hbm_to_vmem [thread:$0]  %s0, 256, %s28, [#allocation3]
    $region5: #{tpu_custom_call.1} parent=1 // pred_fallthru
      _
    // Predicated region
    $region6: #{tpu_custom_call.1} parent=1 // pred_check
      _
    $region7: #{tpu_custom_call.1} parent=1 // pred_check_branch
      %32 = sbr.rel (0) target = $region9
    $region8: #{tpu_custom_call.1} parent=1 // pred_region
      %s34 = ssub.s32 256, 256
      %35 = vsyncadd [#allocation6], %s34
      %s37 = sshll.u32 [#allocation5], 4
      %s38 = int_to_ptr.vmem [resolvable:$true] %s37
      %40 = dma.hbm_to_vmem [thread:$0]  %s1, 256, %s38, [#allocation6]
    $region9: #{tpu_custom_call.1} parent=1 // pred_fallthru
      _
    // Predicated region
    $region10: #{tpu_custom_call.1} parent=1 // pred_check
      _
    $region11: #{tpu_custom_call.1} parent=1 // pred_check_branch
      %42 = sbr.rel (0) target = $region13
    $region12: #{tpu_custom_call.1} parent=1 // pred_region
      %s44 = ssub.s32 2048, 2048
      %45 = vsyncadd [#allocation6], %s44
      %s46 = sshll.u32 [#allocation7], 4
      %s47 = int_to_ptr.vmem [resolvable:$true] %s46
      %52 = dma.hbm_to_vmem [thread:$0]  %s2, 2048, %s47, [#allocation6], 64, 64, 4
    $region13: #{tpu_custom_call.1} parent=1 // pred_fallthru
      _
    // Predicated region
    $region14: #{tpu_custom_call.1} parent=1 // pred_check
      _
    $region15: #{tpu_custom_call.1} parent=1 // pred_check_branch
      %54 = sbr.rel (0) target = $region17
    $region16: #{tpu_custom_call.1} parent=1 // pred_region
      _
    $region17: #{tpu_custom_call.1} parent=1 // pred_fallthru
      _
    // Predicated region
    $region18: #{tpu_custom_call.1} parent=1 // pred_check
      _
    $region19: #{tpu_custom_call.1} parent=1 // pred_check_branch
      %56 = sbr.rel (0) target = $region21
    $region20: #{tpu_custom_call.1} parent=1 // pred_region
      %s58 = ssub.s32 2048, 2048
      %59 = vsyncadd [#allocation9], %s58
      %s60 = sshll.u32 [#allocation8], 4
      %s61 = int_to_ptr.vmem [resolvable:$true] %s60
      %66 = dma.hbm_to_vmem [thread:$0]  %s4, 2048, %s61, [#allocation9], 64, 64, 4
    $region21: #{tpu_custom_call.1} parent=1 // pred_fallthru
      _
    // Predicated region
    $region22: #{tpu_custom_call.1} parent=1 // pred_check
      _
    $region23: #{tpu_custom_call.1} parent=1 // pred_check_branch
      %68 = sbr.rel (0) target = $region25
    $region24: #{tpu_custom_call.1} parent=1 // pred_region
      _
    $region25: #{tpu_custom_call.1} parent=1 // pred_fallthru
      _
    // Predicated region
    $region26: #{tpu_custom_call.1} parent=1 // pred_check
      _
    $region27: #{tpu_custom_call.1} parent=1 // pred_check_branch
      %70 = sbr.rel (0) target = $region29
    $region28: #{tpu_custom_call.1} parent=1 // pred_region
      %s72 = ssub.s32 1024, 1024
      %73 = vsyncadd [#allocation9], %s72
      %s74 = sshll.u32 [#allocation10], 4
      %s75 = int_to_ptr.vmem [resolvable:$true] %s74
      %80 = dma.hbm_to_vmem [thread:$0]  %s6, 1024, %s75, [#allocation9], 64, 64, 4
    $region29: #{tpu_custom_call.1} parent=1 // pred_fallthru
      _
    // Predicated region
    $region30: #{tpu_custom_call.1} parent=1 // pred_check
      _
    $region31: #{tpu_custom_call.1} parent=1 // pred_check_branch
      %82 = sbr.rel (0) target = $region33
    $region32: #{tpu_custom_call.1} parent=1 // pred_region
      %s84 = ssub.s32 1024, 1024
      %85 = vsyncadd [#allocation12], %s84
      %s86 = sshll.u32 [#allocation11], 4
      %s87 = int_to_ptr.vmem [resolvable:$true] %s86
      %92 = dma.hbm_to_vmem [thread:$0]  %s7, 1024, %s87, [#allocation12], 64, 64, 4
    $region33: #{tpu_custom_call.1} parent=1 // pred_fallthru
      _
    // Predicated region
    $region34: #{tpu_custom_call.1} parent=1 // pred_check
      _
    $region35: #{tpu_custom_call.1} parent=1 // pred_check_branch
      %94 = sbr.rel (0) target = $region37
    $region36: #{tpu_custom_call.1} parent=1 // pred_region
      _
    $region37: #{tpu_custom_call.1} parent=1 // pred_fallthru
      _
    // Predicated region
    $region38: #{tpu_custom_call.1} parent=1 // pred_check
      _
    $region39: #{tpu_custom_call.1} parent=1 // pred_check_branch
      %96 = sbr.rel (0) target = $region41
    $region40: #{tpu_custom_call.1} parent=1 // pred_region
      %s98 = ssub.s32 1024, 1024
      %99 = vsyncadd [#allocation12], %s98
      %s100 = sshll.u32 [#allocation13], 4
      %s101 = int_to_ptr.vmem [resolvable:$true] %s100
      %106 = dma.hbm_to_vmem [thread:$0]  %s9, 1024, %s101, [#allocation12], 64, 64, 4
    $region41: #{tpu_custom_call.1} parent=1 // pred_fallthru
      _
    // Predicated region
    $region42: #{tpu_custom_call.1} parent=1 // pred_check
      _
    $region43: #{tpu_custom_call.1} parent=1 // pred_check_branch
      %108 = sbr.rel (0) target = $region45
    $region44: #{tpu_custom_call.1} parent=1 // pred_region
      _
    $region45: #{tpu_custom_call.1} parent=1 // pred_fallthru
      _
    // Predicated region
    $region46: #{tpu_custom_call.1} parent=1 // pred_check
      _
    $region47: #{tpu_custom_call.1} parent=1 // pred_check_branch
      %110 = sbr.rel (0) target = $region49
    $region48: #{tpu_custom_call.1} parent=1 // pred_region
      %111 = dma.done [#allocation3], 256
    $region49: #{tpu_custom_call.1} parent=1 // pred_fallthru
      _
    // Predicated region
    $region50: #{tpu_custom_call.1} parent=1 // pred_check
      _
    $region51: #{tpu_custom_call.1} parent=1 // pred_check_branch
      %113 = sbr.rel (0) target = $region53
    $region52: #{tpu_custom_call.1} parent=1 // pred_region
      %114 = dma.done [#allocation6], 256
    $region53: #{tpu_custom_call.1} parent=1 // pred_fallthru
      _
    // Predicated region
    $region54: #{tpu_custom_call.1} parent=1 // pred_check
      _
    $region55: #{tpu_custom_call.1} parent=1 // pred_check_branch
      %116 = sbr.rel (0) target = $region57
    $region56: #{tpu_custom_call.1} parent=1 // pred_region
      %117 = dma.done [#allocation6], 2048
    $region57: #{tpu_custom_call.1} parent=1 // pred_fallthru
      _
    // Predicated region
    $region58: #{tpu_custom_call.1} parent=1 // pred_check
      _
    $region59: #{tpu_custom_call.1} parent=1 // pred_check_branch
      %119 = sbr.rel (0) target = $region61
    $region60: #{tpu_custom_call.1} parent=1 // pred_region
      %120 = dma.done [#allocation9], 2048
    $region61: #{tpu_custom_call.1} parent=1 // pred_fallthru
      _
    // Predicated region
    $region62: #{tpu_custom_call.1} parent=1 // pred_check
      _
    $region63: #{tpu_custom_call.1} parent=1 // pred_check_branch
      %122 = sbr.rel (0) target = $region65
    $region64: #{tpu_custom_call.1} parent=1 // pred_region
      %123 = dma.done [#allocation9], 1024
    $region65: #{tpu_custom_call.1} parent=1 // pred_fallthru
      _
    // Predicated region
    $region66: #{tpu_custom_call.1} parent=1 // pred_check
      _
    $region67: #{tpu_custom_call.1} parent=1 // pred_check_branch
      %125 = sbr.rel (0) target = $region69
    $region68: #{tpu_custom_call.1} parent=1 // pred_region
      %126 = dma.done [#allocation12], 1024
    $region69: #{tpu_custom_call.1} parent=1 // pred_fallthru
      _
    // Predicated region
    $region70: #{tpu_custom_call.1} parent=1 // pred_check
      _
    $region71: #{tpu_custom_call.1} parent=1 // pred_check_branch
      %128 = sbr.rel (0) target = $region73
    $region72: #{tpu_custom_call.1} parent=1 // pred_region
      %129 = dma.done [#allocation12], 1024
    $region73: #{tpu_custom_call.1} parent=1 // pred_fallthru
      _
    %v131 = vld [vmem:[#allocation2] sm:$0xff]
    %v132 = vld [vmem:[#allocation2 + $0x8] sm:$0xff]
    %v133 = vpack.c.bf16 %v131, %v131
    %v134 = vpack.c.bf16 %v132, %v132
    %v135 = vld [vmem:[#allocation5] sm:$0xff]
    %v136 = vld [vmem:[#allocation5 + $0x8] sm:$0xff]
    %v137 = vpack.c.bf16 %v135, %v135
    %v138 = vpack.c.bf16 %v136, %v136
    %v139 = vld [vmem:[#allocation7] sm:$0xf]
    %v140 = vld [vmem:[#allocation7 + $0x4] sm:$0xf]
    %v141 = vld [vmem:[#allocation7 + $0x8] sm:$0xf]
    %v142 = vld [vmem:[#allocation7 + $0xc] sm:$0xf]
    %v143 = vld [vmem:[#allocation7 + $0x10] sm:$0xf]
    %v144 = vld [vmem:[#allocation7 + $0x14] sm:$0xf]
    %v145 = vld [vmem:[#allocation7 + $0x18] sm:$0xf]
    %v146 = vld [vmem:[#allocation7 + $0x1c] sm:$0xf]
    %v147 = vld [vmem:[#allocation7 + $0x20] sm:$0xf]
    %v148 = vld [vmem:[#allocation7 + $0x24] sm:$0xf]
    %v149 = vld [vmem:[#allocation7 + $0x28] sm:$0xf]
    %v150 = vld [vmem:[#allocation7 + $0x2c] sm:$0xf]
    %v151 = vld [vmem:[#allocation7 + $0x30] sm:$0xf]
    %v152 = vld [vmem:[#allocation7 + $0x34] sm:$0xf]
    %v153 = vld [vmem:[#allocation7 + $0x38] sm:$0xf]
    %v154 = vld [vmem:[#allocation7 + $0x3c] sm:$0xf]
    %v155 = vld [vmem:[#allocation7 + $0x40] sm:$0xf]
    %v156 = vld [vmem:[#allocation7 + $0x44] sm:$0xf]
    %v157 = vld [vmem:[#allocation7 + $0x48] sm:$0xf]
    %v158 = vld [vmem:[#allocation7 + $0x4c] sm:$0xf]
    %v159 = vld [vmem:[#allocation7 + $0x50] sm:$0xf]
    %v160 = vld [vmem:[#allocation7 + $0x54] sm:$0xf]
    %v161 = vld [vmem:[#allocation7 + $0x58] sm:$0xf]
    %v162 = vld [vmem:[#allocation7 + $0x5c] sm:$0xf]
    %v163 = vld [vmem:[#allocation7 + $0x60] sm:$0xf]
    %v164 = vld [vmem:[#allocation7 + $0x64] sm:$0xf]
    %v165 = vld [vmem:[#allocation7 + $0x68] sm:$0xf]
    %v166 = vld [vmem:[#allocation7 + $0x6c] sm:$0xf]
    %v167 = vld [vmem:[#allocation7 + $0x70] sm:$0xf]
    %v168 = vld [vmem:[#allocation7 + $0x74] sm:$0xf]
    %v169 = vld [vmem:[#allocation7 + $0x78] sm:$0xf]
    %v170 = vld [vmem:[#allocation7 + $0x7c] sm:$0xf]
    %v171 = vld [vmem:[%s3] sm:$0x1]
    %v173 = vlaneseq
    %v174 = vshrl.u32 %v173, 7
    %v175 = vsub.s32 0, %v174
    %v176 = vrot.slane %v171, %v175
    %v210 = vunpack.c.l.b16 %v139
    %v211 = vunpack.c.l.b16 %v140
    %v212 = vunpack.c.l.b16 %v141
    %v213 = vunpack.c.l.b16 %v142
    %v214 = vunpack.c.l.b16 %v143
    %v215 = vunpack.c.l.b16 %v144
    %v216 = vunpack.c.l.b16 %v145
    %v217 = vunpack.c.l.b16 %v146
    %v218 = vunpack.c.l.b16 %v147
    %v219 = vunpack.c.l.b16 %v148
    %v220 = vunpack.c.l.b16 %v149
    %v221 = vunpack.c.l.b16 %v150
    %v222 = vunpack.c.l.b16 %v151
    %v223 = vunpack.c.l.b16 %v152
    %v224 = vunpack.c.l.b16 %v153
    %v225 = vunpack.c.l.b16 %v154
    %v226 = vunpack.c.l.b16 %v155
    %v227 = vunpack.c.l.b16 %v156
    %v228 = vunpack.c.l.b16 %v157
    %v229 = vunpack.c.l.b16 %v158
    %v230 = vunpack.c.l.b16 %v159
    %v231 = vunpack.c.l.b16 %v160
    %v232 = vunpack.c.l.b16 %v161
    %v233 = vunpack.c.l.b16 %v162
    %v234 = vunpack.c.l.b16 %v163
    %v235 = vunpack.c.l.b16 %v164
    %v236 = vunpack.c.l.b16 %v165
    %v237 = vunpack.c.l.b16 %v166
    %v238 = vunpack.c.l.b16 %v167
    %v239 = vunpack.c.l.b16 %v168
    %v240 = vunpack.c.l.b16 %v169
    %v241 = vunpack.c.l.b16 %v170
    %v242 = vpack.c.b16 %v211, %v210
    %v243 = vpack.c.b16 %v213, %v212
    %v244 = vpack.c.b16 %v215, %v214
    %v245 = vpack.c.b16 %v217, %v216
    %v246 = vpack.c.b16 %v219, %v218
    %v247 = vpack.c.b16 %v221, %v220
    %v248 = vpack.c.b16 %v223, %v222
    %v249 = vpack.c.b16 %v225, %v224
    %v250 = vpack.c.b16 %v227, %v226
    %v251 = vpack.c.b16 %v229, %v228
    %v252 = vpack.c.b16 %v231, %v230
    %v253 = vpack.c.b16 %v233, %v232
    %v254 = vpack.c.b16 %v235, %v234
    %v255 = vpack.c.b16 %v237, %v236
    %v256 = vpack.c.b16 %v239, %v238
    %v257 = vpack.c.b16 %v241, %v240
    %274 = vmatprep.subr.bf16.mxu0 0
    %275 = vmatpush1.bf16.msra.mxu0 %v242
    %276 = vmatprep.subr.bf16.mxu0 0
    %277 = vmatpush1.bf16.msra.mxu0 %v243
    %278 = vmatprep.subr.bf16.mxu0 0
    %279 = vmatpush1.bf16.msra.mxu0 %v244
    %280 = vmatprep.subr.bf16.mxu0 0
    %281 = vmatpush1.bf16.msra.mxu0 %v245
    %282 = vmatprep.subr.bf16.mxu0 0
    %283 = vmatpush1.bf16.msra.mxu0 %v246
    %284 = vmatprep.subr.bf16.mxu0 0
    %285 = vmatpush1.bf16.msra.mxu0 %v247
    %286 = vmatprep.subr.bf16.mxu0 0
    %287 = vmatpush1.bf16.msra.mxu0 %v248
    %288 = vmatprep.subr.bf16.mxu0 0
    %289 = vmatpush1.bf16.msra.mxu0 %v249
    %290 = vmatprep.subr.bf16.mxu0 0
    %291 = vmatpush1.bf16.msra.mxu0 %v250
    %292 = vmatprep.subr.bf16.mxu0 0
    %293 = vmatpush1.bf16.msra.mxu0 %v251
    %294 = vmatprep.subr.bf16.mxu0 0
    %295 = vmatpush1.bf16.msra.mxu0 %v252
    %296 = vmatprep.subr.bf16.mxu0 0
    %297 = vmatpush1.bf16.msra.mxu0 %v253
    %298 = vmatprep.subr.bf16.mxu0 0
    %299 = vmatpush1.bf16.msra.mxu0 %v254
    %300 = vmatprep.subr.bf16.mxu0 0
    %301 = vmatpush1.bf16.msra.mxu0 %v255
    %302 = vmatprep.subr.bf16.mxu0 0
    %303 = vmatpush1.bf16.msra.mxu0 %v256
    %304 = vmatprep.subr.bf16.mxu0 0
    %305 = vmatpush1.bf16.msra.mxu0 %v257
    %306 = vmatprep.mubr.bf16.mxu0 %v134
    %307 = vmatmul.mubr.bf16.gmra.mrb[0].mxu0 %v133
    %v308 = vpop.f32.mrb[0].mxu0
    %v309 = vadd.f32 %v176, %v308
    %v310 = vpop.f32.mrb[0].mxu0
    %v311 = vpop.f32.mrb[0].mxu0
    %v312 = vpop.f32.mrb[0].mxu0
    %313 = vdwg.mxu0
    %v314 = vmax.f32 %v309, 0.0
    %v315 = vld [vmem:[#allocation8] sm:$0xf]
    %v316 = vld [vmem:[#allocation8 + $0x4] sm:$0xf]
    %v317 = vld [vmem:[#allocation8 + $0x8] sm:$0xf]
    %v318 = vld [vmem:[#allocation8 + $0xc] sm:$0xf]
    %v319 = vld [vmem:[#allocation8 + $0x10] sm:$0xf]
    %v320 = vld [vmem:[#allocation8 + $0x14] sm:$0xf]
    %v321 = vld [vmem:[#allocation8 + $0x18] sm:$0xf]
    %v322 = vld [vmem:[#allocation8 + $0x1c] sm:$0xf]
    %v323 = vld [vmem:[#allocation8 + $0x20] sm:$0xf]
    %v324 = vld [vmem:[#allocation8 + $0x24] sm:$0xf]
    %v325 = vld [vmem:[#allocation8 + $0x28] sm:$0xf]
    %v326 = vld [vmem:[#allocation8 + $0x2c] sm:$0xf]
    %v327 = vld [vmem:[#allocation8 + $0x30] sm:$0xf]
    %v328 = vld [vmem:[#allocation8 + $0x34] sm:$0xf]
    %v329 = vld [vmem:[#allocation8 + $0x38] sm:$0xf]
    %v330 = vld [vmem:[#allocation8 + $0x3c] sm:$0xf]
    %v331 = vld [vmem:[#allocation8 + $0x40] sm:$0xf]
    %v332 = vld [vmem:[#allocation8 + $0x44] sm:$0xf]
    %v333 = vld [vmem:[#allocation8 + $0x48] sm:$0xf]
    %v334 = vld [vmem:[#allocation8 + $0x4c] sm:$0xf]
    %v335 = vld [vmem:[#allocation8 + $0x50] sm:$0xf]
    %v336 = vld [vmem:[#allocation8 + $0x54] sm:$0xf]
    %v337 = vld [vmem:[#allocation8 + $0x58] sm:$0xf]
    %v338 = vld [vmem:[#allocation8 + $0x5c] sm:$0xf]
    %v339 = vld [vmem:[#allocation8 + $0x60] sm:$0xf]
    %v340 = vld [vmem:[#allocation8 + $0x64] sm:$0xf]
    %v341 = vld [vmem:[#allocation8 + $0x68] sm:$0xf]
    %v342 = vld [vmem:[#allocation8 + $0x6c] sm:$0xf]
    %v343 = vld [vmem:[#allocation8 + $0x70] sm:$0xf]
    %v344 = vld [vmem:[#allocation8 + $0x74] sm:$0xf]
    %v345 = vld [vmem:[#allocation8 + $0x78] sm:$0xf]
    %v346 = vld [vmem:[#allocation8 + $0x7c] sm:$0xf]
    %v347 = vld [vmem:[%s5] sm:$0x1]
    %v349 = vlaneseq
    %v350 = vshrl.u32 %v349, 7
    %v351 = vsub.s32 0, %v350
    %v352 = vrot.slane %v347, %v351
    %v386 = vunpack.c.l.b16 %v315
    %v387 = vunpack.c.l.b16 %v316
    %v388 = vunpack.c.l.b16 %v317
    %v389 = vunpack.c.l.b16 %v318
    %v390 = vunpack.c.l.b16 %v319
    %v391 = vunpack.c.l.b16 %v320
    %v392 = vunpack.c.l.b16 %v321
    %v393 = vunpack.c.l.b16 %v322
    %v394 = vunpack.c.l.b16 %v323
    %v395 = vunpack.c.l.b16 %v324
    %v396 = vunpack.c.l.b16 %v325
    %v397 = vunpack.c.l.b16 %v326
    %v398 = vunpack.c.l.b16 %v327
    %v399 = vunpack.c.l.b16 %v328
    %v400 = vunpack.c.l.b16 %v329
    %v401 = vunpack.c.l.b16 %v330
    %v402 = vunpack.c.l.b16 %v331
    %v403 = vunpack.c.l.b16 %v332
    %v404 = vunpack.c.l.b16 %v333
    %v405 = vunpack.c.l.b16 %v334
    %v406 = vunpack.c.l.b16 %v335
    %v407 = vunpack.c.l.b16 %v336
    %v408 = vunpack.c.l.b16 %v337
    %v409 = vunpack.c.l.b16 %v338
    %v410 = vunpack.c.l.b16 %v339
    %v411 = vunpack.c.l.b16 %v340
    %v412 = vunpack.c.l.b16 %v341
    %v413 = vunpack.c.l.b16 %v342
    %v414 = vunpack.c.l.b16 %v343
    %v415 = vunpack.c.l.b16 %v344
    %v416 = vunpack.c.l.b16 %v345
    %v417 = vunpack.c.l.b16 %v346
    %v418 = vpack.c.b16 %v387, %v386
    %v419 = vpack.c.b16 %v389, %v388
    %v420 = vpack.c.b16 %v391, %v390
    %v421 = vpack.c.b16 %v393, %v392
    %v422 = vpack.c.b16 %v395, %v394
    %v423 = vpack.c.b16 %v397, %v396
    %v424 = vpack.c.b16 %v399, %v398
    %v425 = vpack.c.b16 %v401, %v400
    %v426 = vpack.c.b16 %v403, %v402
    %v427 = vpack.c.b16 %v405, %v404
    %v428 = vpack.c.b16 %v407, %v406
    %v429 = vpack.c.b16 %v409, %v408
    %v430 = vpack.c.b16 %v411, %v410
    %v431 = vpack.c.b16 %v413, %v412
    %v432 = vpack.c.b16 %v415, %v414
    %v433 = vpack.c.b16 %v417, %v416
    %450 = vmatprep.subr.bf16.mxu0 0
    %451 = vmatpush1.bf16.msra.mxu0 %v418
    %452 = vmatprep.subr.bf16.mxu0 0
    %453 = vmatpush1.bf16.msra.mxu0 %v419
    %454 = vmatprep.subr.bf16.mxu0 0
    %455 = vmatpush1.bf16.msra.mxu0 %v420
    %456 = vmatprep.subr.bf16.mxu0 0
    %457 = vmatpush1.bf16.msra.mxu0 %v421
    %458 = vmatprep.subr.bf16.mxu0 0
    %459 = vmatpush1.bf16.msra.mxu0 %v422
    %460 = vmatprep.subr.bf16.mxu0 0
    %461 = vmatpush1.bf16.msra.mxu0 %v423
    %462 = vmatprep.subr.bf16.mxu0 0
    %463 = vmatpush1.bf16.msra.mxu0 %v424
    %464 = vmatprep.subr.bf16.mxu0 0
    %465 = vmatpush1.bf16.msra.mxu0 %v425
    %466 = vmatprep.subr.bf16.mxu0 0
    %467 = vmatpush1.bf16.msra.mxu0 %v426
    %468 = vmatprep.subr.bf16.mxu0 0
    %469 = vmatpush1.bf16.msra.mxu0 %v427
    %470 = vmatprep.subr.bf16.mxu0 0
    %471 = vmatpush1.bf16.msra.mxu0 %v428
    %472 = vmatprep.subr.bf16.mxu0 0
    %473 = vmatpush1.bf16.msra.mxu0 %v429
    %474 = vmatprep.subr.bf16.mxu0 0
    %475 = vmatpush1.bf16.msra.mxu0 %v430
    %476 = vmatprep.subr.bf16.mxu0 0
    %477 = vmatpush1.bf16.msra.mxu0 %v431
    %478 = vmatprep.subr.bf16.mxu0 0
    %479 = vmatpush1.bf16.msra.mxu0 %v432
    %480 = vmatprep.subr.bf16.mxu0 0
    %481 = vmatpush1.bf16.msra.mxu0 %v433
    %482 = vmatprep.mubr.bf16.mxu0 %v138
    %483 = vmatmul.mubr.bf16.gmra.mrb[0].mxu0 %v137
    %v484 = vpop.f32.mrb[0].mxu0
    %v485 = vadd.f32 %v352, %v484
    %v486 = vpop.f32.mrb[0].mxu0
    %v487 = vpop.f32.mrb[0].mxu0
    %v488 = vpop.f32.mrb[0].mxu0
    %489 = vdwg.mxu0
    %v490 = vmax.f32 %v485, 0.0
    %v491 = vpack.c.bf16 %v314, %v314
    %v492 = vld [vmem:[#allocation10] sm:$0xf]
    %v493 = vld [vmem:[#allocation10 + $0x4] sm:$0xf]
    %v494 = vld [vmem:[#allocation10 + $0x8] sm:$0xf]
    %v495 = vld [vmem:[#allocation10 + $0xc] sm:$0xf]
    %v496 = vld [vmem:[#allocation10 + $0x10] sm:$0xf]
    %v497 = vld [vmem:[#allocation10 + $0x14] sm:$0xf]
    %v498 = vld [vmem:[#allocation10 + $0x18] sm:$0xf]
    %v499 = vld [vmem:[#allocation10 + $0x1c] sm:$0xf]
    %v500 = vld [vmem:[#allocation10 + $0x20] sm:$0xf]
    %v501 = vld [vmem:[#allocation10 + $0x24] sm:$0xf]
    %v502 = vld [vmem:[#allocation10 + $0x28] sm:$0xf]
    %v503 = vld [vmem:[#allocation10 + $0x2c] sm:$0xf]
    %v504 = vld [vmem:[#allocation10 + $0x30] sm:$0xf]
    %v505 = vld [vmem:[#allocation10 + $0x34] sm:$0xf]
    %v506 = vld [vmem:[#allocation10 + $0x38] sm:$0xf]
    %v507 = vld [vmem:[#allocation10 + $0x3c] sm:$0xf]
    %v508 = vpack.c.bf16 %v490, %v490
    %v509 = vld [vmem:[#allocation11] sm:$0xf]
    %v510 = vld [vmem:[#allocation11 + $0x4] sm:$0xf]
    %v511 = vld [vmem:[#allocation11 + $0x8] sm:$0xf]
    %v512 = vld [vmem:[#allocation11 + $0xc] sm:$0xf]
    %v513 = vld [vmem:[#allocation11 + $0x10] sm:$0xf]
    %v514 = vld [vmem:[#allocation11 + $0x14] sm:$0xf]
    %v515 = vld [vmem:[#allocation11 + $0x18] sm:$0xf]
    %v516 = vld [vmem:[#allocation11 + $0x1c] sm:$0xf]
    %v517 = vld [vmem:[#allocation11 + $0x20] sm:$0xf]
    %v518 = vld [vmem:[#allocation11 + $0x24] sm:$0xf]
    %v519 = vld [vmem:[#allocation11 + $0x28] sm:$0xf]
    %v520 = vld [vmem:[#allocation11 + $0x2c] sm:$0xf]
    %v521 = vld [vmem:[#allocation11 + $0x30] sm:$0xf]
    %v522 = vld [vmem:[#allocation11 + $0x34] sm:$0xf]
    %v523 = vld [vmem:[#allocation11 + $0x38] sm:$0xf]
    %v524 = vld [vmem:[#allocation11 + $0x3c] sm:$0xf]
    %v541 = vunpack.c.l.b16 %v509
    %v542 = vunpack.c.l.b16 %v510
    %v543 = vunpack.c.l.b16 %v511
    %v544 = vunpack.c.l.b16 %v512
    %v545 = vunpack.c.l.b16 %v513
    %v546 = vunpack.c.l.b16 %v514
    %v547 = vunpack.c.l.b16 %v515
    %v548 = vunpack.c.l.b16 %v516
    %v549 = vunpack.c.l.b16 %v517
    %v550 = vunpack.c.l.b16 %v518
    %v551 = vunpack.c.l.b16 %v519
    %v552 = vunpack.c.l.b16 %v520
    %v553 = vunpack.c.l.b16 %v521
    %v554 = vunpack.c.l.b16 %v522
    %v555 = vunpack.c.l.b16 %v523
    %v556 = vunpack.c.l.b16 %v524
    %v557 = vpack.c.b16 %v542, %v541
    %v558 = vpack.c.b16 %v544, %v543
    %v559 = vpack.c.b16 %v546, %v545
    %v560 = vpack.c.b16 %v548, %v547
    %v561 = vpack.c.b16 %v550, %v549
    %v562 = vpack.c.b16 %v552, %v551
    %v563 = vpack.c.b16 %v554, %v553
    %v564 = vpack.c.b16 %v556, %v555
    %573 = vmatprep.subr.bf16.mxu0 0
    %574 = vmatpush1.bf16.msra.mxu0 %v557
    %575 = vmatprep.subr.bf16.mxu0 0
    %576 = vmatpush1.bf16.msra.mxu0 %v558
    %577 = vmatprep.subr.bf16.mxu0 0
    %578 = vmatpush1.bf16.msra.mxu0 %v559
    %579 = vmatprep.subr.bf16.mxu0 0
    %580 = vmatpush1.bf16.msra.mxu0 %v560
    %581 = vmatprep.subr.bf16.mxu0 0
    %582 = vmatpush1.bf16.msra.mxu0 %v561
    %583 = vmatprep.subr.bf16.mxu0 0
    %584 = vmatpush1.bf16.msra.mxu0 %v562
    %585 = vmatprep.subr.bf16.mxu0 0
    %586 = vmatpush1.bf16.msra.mxu0 %v563
    %587 = vmatprep.subr.bf16.mxu0 0
    %588 = vmatpush1.bf16.msra.mxu0 %v564
    %589 = vmatprep.subr.bf16.mxu0 0
    %590 = vmatpush1.bf16.msra.mxu0 0
    %591 = vmatprep.subr.bf16.mxu0 0
    %592 = vmatpush1.bf16.msra.mxu0 0
    %593 = vmatprep.subr.bf16.mxu0 0
    %594 = vmatpush1.bf16.msra.mxu0 0
    %595 = vmatprep.subr.bf16.mxu0 0
    %596 = vmatpush1.bf16.msra.mxu0 0
    %597 = vmatprep.subr.bf16.mxu0 0
    %598 = vmatpush1.bf16.msra.mxu0 0
    %599 = vmatprep.subr.bf16.mxu0 0
    %600 = vmatpush1.bf16.msra.mxu0 0
    %601 = vmatprep.subr.bf16.mxu0 0
    %602 = vmatpush1.bf16.msra.mxu0 0
    %603 = vmatprep.subr.bf16.mxu0 0
    %604 = vmatpush1.bf16.msra.mxu0 0
    %605 = vmatprep.mubr.bf16.mxu0 0
    %606 = vmatmul.mubr.bf16.gmra.mrb[0].mxu0 %v508
    %v607 = vpop.f32.mrb[0].mxu0
    %v608 = vadd.f32 0.0, %v607
    %v609 = vpop.f32.mrb[0].mxu0
    %v610 = vpop.f32.mrb[0].mxu0
    %v611 = vpop.f32.mrb[0].mxu0
    %612 = vdwg.mxu0
    %v629 = vunpack.c.l.b16 %v492
    %v630 = vunpack.c.l.b16 %v493
    %v631 = vunpack.c.l.b16 %v494
    %v632 = vunpack.c.l.b16 %v495
    %v633 = vunpack.c.l.b16 %v496
    %v634 = vunpack.c.l.b16 %v497
    %v635 = vunpack.c.l.b16 %v498
    %v636 = vunpack.c.l.b16 %v499
    %v637 = vunpack.c.l.b16 %v500
    %v638 = vunpack.c.l.b16 %v501
    %v639 = vunpack.c.l.b16 %v502
    %v640 = vunpack.c.l.b16 %v503
    %v641 = vunpack.c.l.b16 %v504
    %v642 = vunpack.c.l.b16 %v505
    %v643 = vunpack.c.l.b16 %v506
    %v644 = vunpack.c.l.b16 %v507
    %v645 = vpack.c.b16 %v630, %v629
    %v646 = vpack.c.b16 %v632, %v631
    %v647 = vpack.c.b16 %v634, %v633
    %v648 = vpack.c.b16 %v636, %v635
    %v649 = vpack.c.b16 %v638, %v637
    %v650 = vpack.c.b16 %v640, %v639
    %v651 = vpack.c.b16 %v642, %v641
    %v652 = vpack.c.b16 %v644, %v643
    %661 = vmatprep.subr.bf16.mxu0 0
    %662 = vmatpush1.bf16.msra.mxu0 %v645
    %663 = vmatprep.subr.bf16.mxu0 0
    %664 = vmatpush1.bf16.msra.mxu0 %v646
    %665 = vmatprep.subr.bf16.mxu0 0
    %666 = vmatpush1.bf16.msra.mxu0 %v647
    %667 = vmatprep.subr.bf16.mxu0 0
    %668 = vmatpush1.bf16.msra.mxu0 %v648
    %669 = vmatprep.subr.bf16.mxu0 0
    %670 = vmatpush1.bf16.msra.mxu0 %v649
    %671 = vmatprep.subr.bf16.mxu0 0
    %672 = vmatpush1.bf16.msra.mxu0 %v650
    %673 = vmatprep.subr.bf16.mxu0 0
    %674 = vmatpush1.bf16.msra.mxu0 %v651
    %675 = vmatprep.subr.bf16.mxu0 0
    %676 = vmatpush1.bf16.msra.mxu0 %v652
    %677 = vmatprep.subr.bf16.mxu0 0
    %678 = vmatpush1.bf16.msra.mxu0 0
    %679 = vmatprep.subr.bf16.mxu0 0
    %680 = vmatpush1.bf16.msra.mxu0 0
    %681 = vmatprep.subr.bf16.mxu0 0
    %682 = vmatpush1.bf16.msra.mxu0 0
    %683 = vmatprep.subr.bf16.mxu0 0
    %684 = vmatpush1.bf16.msra.mxu0 0
    %685 = vmatprep.subr.bf16.mxu0 0
    %686 = vmatpush1.bf16.msra.mxu0 0
    %687 = vmatprep.subr.bf16.mxu0 0
    %688 = vmatpush1.bf16.msra.mxu0 0
    %689 = vmatprep.subr.bf16.mxu0 0
    %690 = vmatpush1.bf16.msra.mxu0 0
    %691 = vmatprep.subr.bf16.mxu0 0
    %692 = vmatpush1.bf16.msra.mxu0 0
    %693 = vmatprep.mubr.bf16.mxu0 0
    %694 = vmatmul.mubr.bf16.gmra.mrb[0].mxu0 %v491
    %v695 = vpop.f32.mrb[0].mxu0
    %v696 = vadd.f32 %v608, %v695
    %v697 = vpop.f32.mrb[0].mxu0
    %v698 = vpop.f32.mrb[0].mxu0
    %v699 = vpop.f32.mrb[0].mxu0
    %700 = vdwg.mxu0
    %v701 = vld [vmem:[%s8] sm:$0x1]
    %v703 = vlaneseq
    %v704 = vshrl.u32 %v703, 7
    %v705 = vsub.s32 0, %v704
    %v706 = vrot.slane %v701, %v705
    %v708 = vadd.f32 %v696, %v706
    %v709 = vmax.f32 %v708, 0.0
    %v710 = vpack.c.bf16 %v709, %v709
    %v711 = vld [vmem:[#allocation13] sm:$0xf]
    %v712 = vld [vmem:[#allocation13 + $0x4] sm:$0xf]
    %v713 = vld [vmem:[#allocation13 + $0x8] sm:$0xf]
    %v714 = vld [vmem:[#allocation13 + $0xc] sm:$0xf]
    %v715 = vld [vmem:[#allocation13 + $0x10] sm:$0xf]
    %v716 = vld [vmem:[#allocation13 + $0x14] sm:$0xf]
    %v717 = vld [vmem:[#allocation13 + $0x18] sm:$0xf]
    %v718 = vld [vmem:[#allocation13 + $0x1c] sm:$0xf]
    %v719 = vld [vmem:[#allocation13 + $0x20] sm:$0xf]
    %v720 = vld [vmem:[#allocation13 + $0x24] sm:$0xf]
    %v721 = vld [vmem:[#allocation13 + $0x28] sm:$0xf]
    %v722 = vld [vmem:[#allocation13 + $0x2c] sm:$0xf]
    %v723 = vld [vmem:[#allocation13 + $0x30] sm:$0xf]
    %v724 = vld [vmem:[#allocation13 + $0x34] sm:$0xf]
    %v725 = vld [vmem:[#allocation13 + $0x38] sm:$0xf]
    %v726 = vld [vmem:[#allocation13 + $0x3c] sm:$0xf]
    %v727 = vld [vmem:[%s10] sm:$0x1]
    %v729 = vlaneseq
    %v730 = vshrl.u32 %v729, 7
    %v731 = vsub.s32 0, %v730
    %v732 = vrot.slane %v727, %v731
    %v750 = vunpack.c.l.b16 %v711
    %v751 = vunpack.c.l.b16 %v712
    %v752 = vunpack.c.l.b16 %v713
    %v753 = vunpack.c.l.b16 %v714
    %v754 = vunpack.c.l.b16 %v715
    %v755 = vunpack.c.l.b16 %v716
    %v756 = vunpack.c.l.b16 %v717
    %v757 = vunpack.c.l.b16 %v718
    %v758 = vunpack.c.l.b16 %v719
    %v759 = vunpack.c.l.b16 %v720
    %v760 = vunpack.c.l.b16 %v721
    %v761 = vunpack.c.l.b16 %v722
    %v762 = vunpack.c.l.b16 %v723
    %v763 = vunpack.c.l.b16 %v724
    %v764 = vunpack.c.l.b16 %v725
    %v765 = vunpack.c.l.b16 %v726
    %v766 = vpack.c.b16 %v751, %v750
    %v767 = vpack.c.b16 %v753, %v752
    %v768 = vpack.c.b16 %v755, %v754
    %v769 = vpack.c.b16 %v757, %v756
    %v770 = vpack.c.b16 %v759, %v758
    %v771 = vpack.c.b16 %v761, %v760
    %v772 = vpack.c.b16 %v763, %v762
    %v773 = vpack.c.b16 %v765, %v764
    %782 = vmatprep.subr.bf16.mxu0 0
    %783 = vmatpush1.bf16.msra.mxu0 %v766
    %784 = vmatprep.subr.bf16.mxu0 0
    %785 = vmatpush1.bf16.msra.mxu0 %v767
    %786 = vmatprep.subr.bf16.mxu0 0
    %787 = vmatpush1.bf16.msra.mxu0 %v768
    %788 = vmatprep.subr.bf16.mxu0 0
    %789 = vmatpush1.bf16.msra.mxu0 %v769
    %790 = vmatprep.subr.bf16.mxu0 0
    %791 = vmatpush1.bf16.msra.mxu0 %v770
    %792 = vmatprep.subr.bf16.mxu0 0
    %793 = vmatpush1.bf16.msra.mxu0 %v771
    %794 = vmatprep.subr.bf16.mxu0 0
    %795 = vmatpush1.bf16.msra.mxu0 %v772
    %796 = vmatprep.subr.bf16.mxu0 0
    %797 = vmatpush1.bf16.msra.mxu0 %v773
    %798 = vmatprep.subr.bf16.mxu0 0
    %799 = vmatpush1.bf16.msra.mxu0 0
    %800 = vmatprep.subr.bf16.mxu0 0
    %801 = vmatpush1.bf16.msra.mxu0 0
    %802 = vmatprep.subr.bf16.mxu0 0
    %803 = vmatpush1.bf16.msra.mxu0 0
    %804 = vmatprep.subr.bf16.mxu0 0
    %805 = vmatpush1.bf16.msra.mxu0 0
    %806 = vmatprep.subr.bf16.mxu0 0
    %807 = vmatpush1.bf16.msra.mxu0 0
    %808 = vmatprep.subr.bf16.mxu0 0
    %809 = vmatpush1.bf16.msra.mxu0 0
    %810 = vmatprep.subr.bf16.mxu0 0
    %811 = vmatpush1.bf16.msra.mxu0 0
    %812 = vmatprep.subr.bf16.mxu0 0
    %813 = vmatpush1.bf16.msra.mxu0 0
    %814 = vmatprep.mubr.bf16.mxu0 0
    %815 = vmatmul.mubr.bf16.gmra.mrb[0].mxu0 %v710
    %v816 = vpop.f32.mrb[0].mxu0
    %v817 = vadd.f32 %v732, %v816
    %v818 = vpop.f32.mrb[0].mxu0
    %v819 = vpop.f32.mrb[0].mxu0
    %v820 = vpop.f32.mrb[0].mxu0
    %821 = vdwg.mxu0
    %822 = vst [vmem:[#allocation14] sm:$0xff] %v817
    // Predicated region
    $region74: #{tpu_custom_call.1} parent=1 // pred_check
      _
    $region75: #{tpu_custom_call.1} parent=1 // pred_check_branch
      %824 = sbr.rel (0) target = $region77
    $region76: #{tpu_custom_call.1} parent=1 // pred_region
      %s826 = ssub.s32 128, 128
      %827 = vsyncadd [#allocation4], %s826
      %s829 = sshll.u32 [#allocation14], 4
      %s830 = int_to_ptr.vmem [resolvable:$true] %s829
      %832 = dma.vmem_to_hbm [thread:$0]  %s830, 128, %s11, [#allocation4]
    $region77: #{tpu_custom_call.1} parent=1 // pred_fallthru
      _
    // Predicated region
    $region78: #{tpu_custom_call.1} parent=1 // pred_check
      _
    $region79: #{tpu_custom_call.1} parent=1 // pred_check_branch
      %834 = sbr.rel (0) target = $region81
    $region80: #{tpu_custom_call.1} parent=1 // pred_region
      %835 = dma.done [#allocation4], 128
    $region81: #{tpu_custom_call.1} parent=1 // pred_fallthru
      _
    %836 = vsyncpa [#allocation3], 1
    %837 = vsyncpa [#allocation6], 1
    %838 = vsyncpa [#allocation9], 1
    %839 = vsyncpa [#allocation12], 1
    %840 = vsyncpa [#allocation4], 1

// kernel: tpu_custom_call.1
$region0: #{tpu_custom_call.1}
  #allocation0 [shape = 'u32[]', space=smem, size = 0x4, offset = 0x4, fixed_abs, tag = 'smem constant byte address 0x4 - core index']
  #allocation1 [shape = 'u32[144,128]{1,0:T(1,128)}', space=vmem, size = 0x12000, scoped, tag = 'internal scratch']
  %s0 = inlined_call_operand.hbm [shape: f32[8,256], index: 0, kind: input, shape index: {}]
  %s1 = inlined_call_operand.hbm [shape: f32[8,256], index: 1, kind: input, shape index: {}]
  %s2 = inlined_call_operand.hbm [shape: bf16[256,128], index: 2, kind: input, shape index: {}]
  %s3 = inlined_call_operand.vmem [shape: f32[1,128], index: 3, kind: input, shape index: {}]
  %s4 = inlined_call_operand.hbm [shape: bf16[256,128], index: 4, kind: input, shape index: {}]
  %s5 = inlined_call_operand.vmem [shape: f32[1,128], index: 5, kind: input, shape index: {}]
  %s6 = inlined_call_operand.hbm [shape: bf16[128,128], index: 6, kind: input, shape index: {}]
  %s7 = inlined_call_operand.hbm [shape: bf16[128,128], index: 7, kind: input, shape index: {}]
  %s8 = inlined_call_operand.vmem [shape: f32[1,128], index: 8, kind: input, shape index: {}]
  %s9 = inlined_call_operand.hbm [shape: bf16[128,128], index: 9, kind: input, shape index: {}]
  %s10 = inlined_call_operand.vmem [shape: f32[1,128], index: 10, kind: input, shape index: {}]
  %s11 = inlined_call_operand.hbm [shape: f32[8,128], index: 11, kind: output, shape index: {}]
  %s12 = sld [smem:[#allocation0]]
  $region82: #{tpu_custom_call.1} parent=0
    _
  %s14 = ssub.s32 1, %s12
  %s15 = scalar_select 0, %s14, %s12
  $region1: #{tpu_custom_call.1} parent=0
    #allocation2 [shape = 'u8[8192]{0}', space=vmem, size = 0x2000, scoped, tag = 'input window, operand 0, single buffered']
    #allocation3 [shape = 's32[1]{0}', space=sflag, size = 0x4, scoped, tag = 'scoped memory for tpu_custom_call.1']
    #allocation4 [shape = 's32[1]{0}', space=sflag, size = 0x4, scoped, tag = 'scoped memory for tpu_custom_call.1']
    #allocation5 [shape = 'u8[8192]{0}', space=vmem, size = 0x2000, scoped, tag = 'input window, operand 1, single buffered']
    #allocation6 [shape = 's32[1]{0}', space=sflag, size = 0x4, scoped, tag = 'scoped memory for tpu_custom_call.1']
    #allocation7 [shape = 'u8[65536]{0}', space=vmem, size = 0x10000, scoped, tag = 'input window, operand 2, single buffered']
    #allocation8 [shape = 'u8[65536]{0}', space=vmem, size = 0x10000, scoped, tag = 'input window, operand 4, single buffered']
    #allocation9 [shape = 's32[1]{0}', space=sflag, size = 0x4, scoped, tag = 'scoped memory for tpu_custom_call.1']
    #allocation10 [shape = 'u8[32768]{0}', space=vmem, size = 0x8000, scoped, tag = 'input window, operand 6, single buffered']
    #allocation11 [shape = 'u8[32768]{0}', space=vmem, size = 0x8000, scoped, tag = 'input window, operand 7, single buffered']
    #allocation12 [shape = 's32[1]{0}', space=sflag, size = 0x4, scoped, tag = 'scoped memory for tpu_custom_call.1']
    #allocation13 [shape = 'u8[32768]{0}', space=vmem, size = 0x8000, scoped, tag = 'input window, operand 9, single buffered']
    #allocation14 [shape = 'u8[4096]{0}', space=vmem, size = 0x1000, scoped, tag = 'output window, operand 0, single buffered']
    %16 = vsyncpa [#allocation3], 0
    %17 = vsyncpa [#allocation6], 0
    %18 = vsyncpa [#allocation9], 0
    %19 = vsyncpa [#allocation12], 0
    %20 = vsyncpa [#allocation4], 0
    // Predicated region
    $region2: #{tpu_custom_call.1} parent=1 // pred_check
      _
    $region3: #{tpu_custom_call.1} parent=1 // pred_check_branch
      %22 = sbr.rel (0) target = $region5
    $region4: #{tpu_custom_call.1} parent=1 // pred_region
      %s24 = ssub.s32 256, 256
      %25 = vsyncadd [#allocation3], %s24
      %s27 = sshll.u32 [#allocation2], 4
      %s28 = int_to_ptr.vmem [resolvable:$true] %s27
      %30 = dma.hbm_to_vmem [thread:$0]  %s0, 256, %s28, [#allocation3]
    $region5: #{tpu_custom_call.1} parent=1 // pred_fallthru
      _
    // Predicated region
    $region6: #{tpu_custom_call.1} parent=1 // pred_check
      _
    $region7: #{tpu_custom_call.1} parent=1 // pred_check_branch
      %32 = sbr.rel (0) target = $region9
    $region8: #{tpu_custom_call.1} parent=1 // pred_region
      %s34 = ssub.s32 256, 256
      %35 = vsyncadd [#allocation6], %s34
      %s37 = sshll.u32 [#allocation5], 4
      %s38 = int_to_ptr.vmem [resolvable:$true] %s37
      %40 = dma.hbm_to_vmem [thread:$0]  %s1, 256, %s38, [#allocation6]
    $region9: #{tpu_custom_call.1} parent=1 // pred_fallthru
      _
    // Predicated region
    $region10: #{tpu_custom_call.1} parent=1 // pred_check
      _
    $region11: #{tpu_custom_call.1} parent=1 // pred_check_branch
      %42 = sbr.rel (0) target = $region13
    $region12: #{tpu_custom_call.1} parent=1 // pred_region
      %s44 = ssub.s32 2048, 2048
      %45 = vsyncadd [#allocation6], %s44
      %s46 = sshll.u32 [#allocation7], 4
      %s47 = int_to_ptr.vmem [resolvable:$true] %s46
      %52 = dma.hbm_to_vmem [thread:$0]  %s2, 2048, %s47, [#allocation6], 64, 64, 4
    $region13: #{tpu_custom_call.1} parent=1 // pred_fallthru
      _
    // Predicated region
    $region14: #{tpu_custom_call.1} parent=1 // pred_check
      _
    $region15: #{tpu_custom_call.1} parent=1 // pred_check_branch
      %54 = sbr.rel (0) target = $region17
    $region16: #{tpu_custom_call.1} parent=1 // pred_region
      _
    $region17: #{tpu_custom_call.1} parent=1 // pred_fallthru
      _
    // Predicated region
    $region18: #{tpu_custom_call.1} parent=1 // pred_check
      _
    $region19: #{tpu_custom_call.1} parent=1 // pred_check_branch
      %56 = sbr.rel (0) target = $region21
    $region20: #{tpu_custom_call.1} parent=1 // pred_region
      %s58 = ssub.s32 2048, 2048
      %59 = vsyncadd [#allocation9], %s58
      %s60 = sshll.u32 [#allocation8], 4
      %s61 = int_to_ptr.vmem [resolvable:$true] %s60
      %66 = dma.hbm_to_vmem [thread:$0]  %s4, 2048, %s61, [#allocation9], 64, 64, 4
    $region21: #{tpu_custom_call.1} parent=1 // pred_fallthru
      _
    // Predicated region
    $region22: #{tpu_custom_call.1} parent=1 // pred_check
      _
    $region23: #{tpu_custom_call.1} parent=1 // pred_check_branch
      %68 = sbr.rel (0) target = $region25
    $region24: #{tpu_custom_call.1} parent=1 // pred_region
      _
    $region25: #{tpu_custom_call.1} parent=1 // pred_fallthru
      _
    // Predicated region
    $region26: #{tpu_custom_call.1} parent=1 // pred_check
      _
    $region27: #{tpu_custom_call.1} parent=1 // pred_check_branch
      %70 = sbr.rel (0) target = $region29
    $region28: #{tpu_custom_call.1} parent=1 // pred_region
      %s72 = ssub.s32 1024, 1024
      %73 = vsyncadd [#allocation9], %s72
      %s74 = sshll.u32 [#allocation10], 4
      %s75 = int_to_ptr.vmem [resolvable:$true] %s74
      %80 = dma.hbm_to_vmem [thread:$0]  %s6, 1024, %s75, [#allocation9], 64, 64, 4
    $region29: #{tpu_custom_call.1} parent=1 // pred_fallthru
      _
    // Predicated region
    $region30: #{tpu_custom_call.1} parent=1 // pred_check
      _
    $region31: #{tpu_custom_call.1} parent=1 // pred_check_branch
      %82 = sbr.rel (0) target = $region33
    $region32: #{tpu_custom_call.1} parent=1 // pred_region
      %s84 = ssub.s32 1024, 1024
      %85 = vsyncadd [#allocation12], %s84
      %s86 = sshll.u32 [#allocation11], 4
      %s87 = int_to_ptr.vmem [resolvable:$true] %s86
      %92 = dma.hbm_to_vmem [thread:$0]  %s7, 1024, %s87, [#allocation12], 64, 64, 4
    $region33: #{tpu_custom_call.1} parent=1 // pred_fallthru
      _
    // Predicated region
    $region34: #{tpu_custom_call.1} parent=1 // pred_check
      _
    $region35: #{tpu_custom_call.1} parent=1 // pred_check_branch
      %94 = sbr.rel (0) target = $region37
    $region36: #{tpu_custom_call.1} parent=1 // pred_region
      _
    $region37: #{tpu_custom_call.1} parent=1 // pred_fallthru
      _
    // Predicated region
    $region38: #{tpu_custom_call.1} parent=1 // pred_check
      _
    $region39: #{tpu_custom_call.1} parent=1 // pred_check_branch
      %96 = sbr.rel (0) target = $region41
    $region40: #{tpu_custom_call.1} parent=1 // pred_region
      %s98 = ssub.s32 1024, 1024
      %99 = vsyncadd [#allocation12], %s98
      %s100 = sshll.u32 [#allocation13], 4
      %s101 = int_to_ptr.vmem [resolvable:$true] %s100
      %106 = dma.hbm_to_vmem [thread:$0]  %s9, 1024, %s101, [#allocation12], 64, 64, 4
    $region41: #{tpu_custom_call.1} parent=1 // pred_fallthru
      _
    // Predicated region
    $region42: #{tpu_custom_call.1} parent=1 // pred_check
      _
    $region43: #{tpu_custom_call.1} parent=1 // pred_check_branch
      %108 = sbr.rel (0) target = $region45
    $region44: #{tpu_custom_call.1} parent=1 // pred_region
      _
    $region45: #{tpu_custom_call.1} parent=1 // pred_fallthru
      _
    // Predicated region
    $region46: #{tpu_custom_call.1} parent=1 // pred_check
      _
    $region47: #{tpu_custom_call.1} parent=1 // pred_check_branch
      %110 = sbr.rel (0) target = $region49
    $region48: #{tpu_custom_call.1} parent=1 // pred_region
      %111 = dma.done [#allocation3], 256
    $region49: #{tpu_custom_call.1} parent=1 // pred_fallthru
      _
    // Predicated region
    $region50: #{tpu_custom_call.1} parent=1 // pred_check
      _
    $region51: #{tpu_custom_call.1} parent=1 // pred_check_branch
      %113 = sbr.rel (0) target = $region53
    $region52: #{tpu_custom_call.1} parent=1 // pred_region
      %114 = dma.done [#allocation6], 256
    $region53: #{tpu_custom_call.1} parent=1 // pred_fallthru
      _
    // Predicated region
    $region54: #{tpu_custom_call.1} parent=1 // pred_check
      _
    $region55: #{tpu_custom_call.1} parent=1 // pred_check_branch
      %116 = sbr.rel (0) target = $region57
    $region56: #{tpu_custom_call.1} parent=1 // pred_region
      %117 = dma.done [#allocation6], 2048
    $region57: #{tpu_custom_call.1} parent=1 // pred_fallthru
      _
    // Predicated region
    $region58: #{tpu_custom_call.1} parent=1 // pred_check
      _
    $region59: #{tpu_custom_call.1} parent=1 // pred_check_branch
      %119 = sbr.rel (0) target = $region61
    $region60: #{tpu_custom_call.1} parent=1 // pred_region
      %120 = dma.done [#allocation9], 2048
    $region61: #{tpu_custom_call.1} parent=1 // pred_fallthru
      _
    // Predicated region
    $region62: #{tpu_custom_call.1} parent=1 // pred_check
      _
    $region63: #{tpu_custom_call.1} parent=1 // pred_check_branch
      %122 = sbr.rel (0) target = $region65
    $region64: #{tpu_custom_call.1} parent=1 // pred_region
      %123 = dma.done [#allocation9], 1024
    $region65: #{tpu_custom_call.1} parent=1 // pred_fallthru
      _
    // Predicated region
    $region66: #{tpu_custom_call.1} parent=1 // pred_check
      _
    $region67: #{tpu_custom_call.1} parent=1 // pred_check_branch
      %125 = sbr.rel (0) target = $region69
    $region68: #{tpu_custom_call.1} parent=1 // pred_region
      %126 = dma.done [#allocation12], 1024
    $region69: #{tpu_custom_call.1} parent=1 // pred_fallthru
      _
    // Predicated region
    $region70: #{tpu_custom_call.1} parent=1 // pred_check
      _
    $region71: #{tpu_custom_call.1} parent=1 // pred_check_branch
      %128 = sbr.rel (0) target = $region73
    $region72: #{tpu_custom_call.1} parent=1 // pred_region
      %129 = dma.done [#allocation12], 1024
    $region73: #{tpu_custom_call.1} parent=1 // pred_fallthru
      _
    %v131 = vld [vmem:[#allocation2] sm:$0xff]
    %v132 = vld [vmem:[#allocation2 + $0x8] sm:$0xff]
    %v133 = vpack.c.bf16 %v131, %v131
    %v134 = vpack.c.bf16 %v132, %v132
    %v135 = vld [vmem:[#allocation5] sm:$0xff]
    %v136 = vld [vmem:[#allocation5 + $0x8] sm:$0xff]
    %v137 = vpack.c.bf16 %v135, %v135
    %v138 = vpack.c.bf16 %v136, %v136
    %v139 = vld [vmem:[#allocation7] sm:$0xf]
    %v140 = vld [vmem:[#allocation7 + $0x4] sm:$0xf]
    %v141 = vld [vmem:[#allocation7 + $0x8] sm:$0xf]
    %v142 = vld [vmem:[#allocation7 + $0xc] sm:$0xf]
    %v143 = vld [vmem:[#allocation7 + $0x10] sm:$0xf]
    %v144 = vld [vmem:[#allocation7 + $0x14] sm:$0xf]
    %v145 = vld [vmem:[#allocation7 + $0x18] sm:$0xf]
    %v146 = vld [vmem:[#allocation7 + $0x1c] sm:$0xf]
    %v147 = vld [vmem:[#allocation7 + $0x20] sm:$0xf]
    %v148 = vld [vmem:[#allocation7 + $0x24] sm:$0xf]
    %v149 = vld [vmem:[#allocation7 + $0x28] sm:$0xf]
    %v150 = vld [vmem:[#allocation7 + $0x2c] sm:$0xf]
    %v151 = vld [vmem:[#allocation7 + $0x30] sm:$0xf]
    %v152 = vld [vmem:[#allocation7 + $0x34] sm:$0xf]
    %v153 = vld [vmem:[#allocation7 + $0x38] sm:$0xf]
    %v154 = vld [vmem:[#allocation7 + $0x3c] sm:$0xf]
    %v155 = vld [vmem:[#allocation7 + $0x40] sm:$0xf]
    %v156 = vld [vmem:[#allocation7 + $0x44] sm:$0xf]
    %v157 = vld [vmem:[#allocation7 + $0x48] sm:$0xf]
    %v158 = vld [vmem:[#allocation7 + $0x4c] sm:$0xf]
    %v159 = vld [vmem:[#allocation7 + $0x50] sm:$0xf]
    %v160 = vld [vmem:[#allocation7 + $0x54] sm:$0xf]
    %v161 = vld [vmem:[#allocation7 + $0x58] sm:$0xf]
    %v162 = vld [vmem:[#allocation7 + $0x5c] sm:$0xf]
    %v163 = vld [vmem:[#allocation7 + $0x60] sm:$0xf]
    %v164 = vld [vmem:[#allocation7 + $0x64] sm:$0xf]
    %v165 = vld [vmem:[#allocation7 + $0x68] sm:$0xf]
    %v166 = vld [vmem:[#allocation7 + $0x6c] sm:$0xf]
    %v167 = vld [vmem:[#allocation7 + $0x70] sm:$0xf]
    %v168 = vld [vmem:[#allocation7 + $0x74] sm:$0xf]
    %v169 = vld [vmem:[#allocation7 + $0x78] sm:$0xf]
    %v170 = vld [vmem:[#allocation7 + $0x7c] sm:$0xf]
    %v171 = vld [vmem:[%s3] sm:$0x1]
    %v173 = vlaneseq
    %v174 = vshrl.u32 %v173, 7
    %v175 = vsub.s32 0, %v174
    %v176 = vrot.slane %v171, %v175
    %v210 = vunpack.c.l.b16 %v139
    %v211 = vunpack.c.l.b16 %v140
    %v212 = vunpack.c.l.b16 %v141
    %v213 = vunpack.c.l.b16 %v142
    %v214 = vunpack.c.l.b16 %v143
    %v215 = vunpack.c.l.b16 %v144
    %v216 = vunpack.c.l.b16 %v145
    %v217 = vunpack.c.l.b16 %v146
    %v218 = vunpack.c.l.b16 %v147
    %v219 = vunpack.c.l.b16 %v148
    %v220 = vunpack.c.l.b16 %v149
    %v221 = vunpack.c.l.b16 %v150
    %v222 = vunpack.c.l.b16 %v151
    %v223 = vunpack.c.l.b16 %v152
    %v224 = vunpack.c.l.b16 %v153
    %v225 = vunpack.c.l.b16 %v154
    %v226 = vunpack.c.l.b16 %v155
    %v227 = vunpack.c.l.b16 %v156
    %v228 = vunpack.c.l.b16 %v157
    %v229 = vunpack.c.l.b16 %v158
    %v230 = vunpack.c.l.b16 %v159
    %v231 = vunpack.c.l.b16 %v160
    %v232 = vunpack.c.l.b16 %v161
    %v233 = vunpack.c.l.b16 %v162
    %v234 = vunpack.c.l.b16 %v163
    %v235 = vunpack.c.l.b16 %v164
    %v236 = vunpack.c.l.b16 %v165
    %v237 = vunpack.c.l.b16 %v166
    %v238 = vunpack.c.l.b16 %v167
    %v239 = vunpack.c.l.b16 %v168
    %v240 = vunpack.c.l.b16 %v169
    %v241 = vunpack.c.l.b16 %v170
    %v242 = vpack.c.b16 %v211, %v210
    %v243 = vpack.c.b16 %v213, %v212
    %v244 = vpack.c.b16 %v215, %v214
    %v245 = vpack.c.b16 %v217, %v216
    %v246 = vpack.c.b16 %v219, %v218
    %v247 = vpack.c.b16 %v221, %v220
    %v248 = vpack.c.b16 %v223, %v222
    %v249 = vpack.c.b16 %v225, %v224
    %v250 = vpack.c.b16 %v227, %v226
    %v251 = vpack.c.b16 %v229, %v228
    %v252 = vpack.c.b16 %v231, %v230
    %v253 = vpack.c.b16 %v233, %v232
    %v254 = vpack.c.b16 %v235, %v234
    %v255 = vpack.c.b16 %v237, %v236
    %v256 = vpack.c.b16 %v239, %v238
    %v257 = vpack.c.b16 %v241, %v240
    %274 = vmatprep.subr.bf16.mxu0 0
    %275 = vmatpush1.bf16.msra.mxu0 %v242
    %276 = vmatprep.subr.bf16.mxu0 0
    %277 = vmatpush1.bf16.msra.mxu0 %v243
    %278 = vmatprep.subr.bf16.mxu0 0
    %279 = vmatpush1.bf16.msra.mxu0 %v244
    %280 = vmatprep.subr.bf16.mxu0 0
    %281 = vmatpush1.bf16.msra.mxu0 %v245
    %282 = vmatprep.subr.bf16.mxu0 0
    %283 = vmatpush1.bf16.msra.mxu0 %v246
    %284 = vmatprep.subr.bf16.mxu0 0
    %285 = vmatpush1.bf16.msra.mxu0 %v247
    %286 = vmatprep.subr.bf16.mxu0 0
    %287 = vmatpush1.bf16.msra.mxu0 %v248
    %288 = vmatprep.subr.bf16.mxu0 0
    %289 = vmatpush1.bf16.msra.mxu0 %v249
    %290 = vmatprep.subr.bf16.mxu0 0
    %291 = vmatpush1.bf16.msra.mxu0 %v250
    %292 = vmatprep.subr.bf16.mxu0 0
    %293 = vmatpush1.bf16.msra.mxu0 %v251
    %294 = vmatprep.subr.bf16.mxu0 0
    %295 = vmatpush1.bf16.msra.mxu0 %v252
    %296 = vmatprep.subr.bf16.mxu0 0
    %297 = vmatpush1.bf16.msra.mxu0 %v253
    %298 = vmatprep.subr.bf16.mxu0 0
    %299 = vmatpush1.bf16.msra.mxu0 %v254
    %300 = vmatprep.subr.bf16.mxu0 0
    %301 = vmatpush1.bf16.msra.mxu0 %v255
    %302 = vmatprep.subr.bf16.mxu0 0
    %303 = vmatpush1.bf16.msra.mxu0 %v256
    %304 = vmatprep.subr.bf16.mxu0 0
    %305 = vmatpush1.bf16.msra.mxu0 %v257
    %306 = vmatprep.mubr.bf16.mxu0 %v134
    %307 = vmatmul.mubr.bf16.gmra.mrb[0].mxu0 %v133
    %v308 = vpop.f32.mrb[0].mxu0
    %v309 = vadd.f32 %v176, %v308
    %v310 = vpop.f32.mrb[0].mxu0
    %v311 = vpop.f32.mrb[0].mxu0
    %v312 = vpop.f32.mrb[0].mxu0
    %313 = vdwg.mxu0
    %v314 = vmax.f32 %v309, 0.0
    %v315 = vld [vmem:[#allocation8] sm:$0xf]
    %v316 = vld [vmem:[#allocation8 + $0x4] sm:$0xf]
    %v317 = vld [vmem:[#allocation8 + $0x8] sm:$0xf]
    %v318 = vld [vmem:[#allocation8 + $0xc] sm:$0xf]
    %v319 = vld [vmem:[#allocation8 + $0x10] sm:$0xf]
    %v320 = vld [vmem:[#allocation8 + $0x14] sm:$0xf]
    %v321 = vld [vmem:[#allocation8 + $0x18] sm:$0xf]
    %v322 = vld [vmem:[#allocation8 + $0x1c] sm:$0xf]
    %v323 = vld [vmem:[#allocation8 + $0x20] sm:$0xf]
    %v324 = vld [vmem:[#allocation8 + $0x24] sm:$0xf]
    %v325 = vld [vmem:[#allocation8 + $0x28] sm:$0xf]
    %v326 = vld [vmem:[#allocation8 + $0x2c] sm:$0xf]
    %v327 = vld [vmem:[#allocation8 + $0x30] sm:$0xf]
    %v328 = vld [vmem:[#allocation8 + $0x34] sm:$0xf]
    %v329 = vld [vmem:[#allocation8 + $0x38] sm:$0xf]
    %v330 = vld [vmem:[#allocation8 + $0x3c] sm:$0xf]
    %v331 = vld [vmem:[#allocation8 + $0x40] sm:$0xf]
    %v332 = vld [vmem:[#allocation8 + $0x44] sm:$0xf]
    %v333 = vld [vmem:[#allocation8 + $0x48] sm:$0xf]
    %v334 = vld [vmem:[#allocation8 + $0x4c] sm:$0xf]
    %v335 = vld [vmem:[#allocation8 + $0x50] sm:$0xf]
    %v336 = vld [vmem:[#allocation8 + $0x54] sm:$0xf]
    %v337 = vld [vmem:[#allocation8 + $0x58] sm:$0xf]
    %v338 = vld [vmem:[#allocation8 + $0x5c] sm:$0xf]
    %v339 = vld [vmem:[#allocation8 + $0x60] sm:$0xf]
    %v340 = vld [vmem:[#allocation8 + $0x64] sm:$0xf]
    %v341 = vld [vmem:[#allocation8 + $0x68] sm:$0xf]
    %v342 = vld [vmem:[#allocation8 + $0x6c] sm:$0xf]
    %v343 = vld [vmem:[#allocation8 + $0x70] sm:$0xf]
    %v344 = vld [vmem:[#allocation8 + $0x74] sm:$0xf]
    %v345 = vld [vmem:[#allocation8 + $0x78] sm:$0xf]
    %v346 = vld [vmem:[#allocation8 + $0x7c] sm:$0xf]
    %v347 = vld [vmem:[%s5] sm:$0x1]
    %v349 = vlaneseq
    %v350 = vshrl.u32 %v349, 7
    %v351 = vsub.s32 0, %v350
    %v352 = vrot.slane %v347, %v351
    %v386 = vunpack.c.l.b16 %v315
    %v387 = vunpack.c.l.b16 %v316
    %v388 = vunpack.c.l.b16 %v317
    %v389 = vunpack.c.l.b16 %v318
    %v390 = vunpack.c.l.b16 %v319
    %v391 = vunpack.c.l.b16 %v320
    %v392 = vunpack.c.l.b16 %v321
    %v393 = vunpack.c.l.b16 %v322
    %v394 = vunpack.c.l.b16 %v323
    %v395 = vunpack.c.l.b16 %v324
    %v396 = vunpack.c.l.b16 %v325
    %v397 = vunpack.c.l.b16 %v326
    %v398 = vunpack.c.l.b16 %v327
    %v399 = vunpack.c.l.b16 %v328
    %v400 = vunpack.c.l.b16 %v329
    %v401 = vunpack.c.l.b16 %v330
    %v402 = vunpack.c.l.b16 %v331
    %v403 = vunpack.c.l.b16 %v332
    %v404 = vunpack.c.l.b16 %v333
    %v405 = vunpack.c.l.b16 %v334
    %v406 = vunpack.c.l.b16 %v335
    %v407 = vunpack.c.l.b16 %v336
    %v408 = vunpack.c.l.b16 %v337
    %v409 = vunpack.c.l.b16 %v338
    %v410 = vunpack.c.l.b16 %v339
    %v411 = vunpack.c.l.b16 %v340
    %v412 = vunpack.c.l.b16 %v341
    %v413 = vunpack.c.l.b16 %v342
    %v414 = vunpack.c.l.b16 %v343
    %v415 = vunpack.c.l.b16 %v344
    %v416 = vunpack.c.l.b16 %v345
    %v417 = vunpack.c.l.b16 %v346
    %v418 = vpack.c.b16 %v387, %v386
    %v419 = vpack.c.b16 %v389, %v388
    %v420 = vpack.c.b16 %v391, %v390
    %v421 = vpack.c.b16 %v393, %v392
    %v422 = vpack.c.b16 %v395, %v394
    %v423 = vpack.c.b16 %v397, %v396
    %v424 = vpack.c.b16 %v399, %v398
    %v425 = vpack.c.b16 %v401, %v400
    %v426 = vpack.c.b16 %v403, %v402
    %v427 = vpack.c.b16 %v405, %v404
    %v428 = vpack.c.b16 %v407, %v406
    %v429 = vpack.c.b16 %v409, %v408
    %v430 = vpack.c.b16 %v411, %v410
    %v431 = vpack.c.b16 %v413, %v412
    %v432 = vpack.c.b16 %v415, %v414
    %v433 = vpack.c.b16 %v417, %v416
    %450 = vmatprep.subr.bf16.mxu0 0
    %451 = vmatpush1.bf16.msra.mxu0 %v418
    %452 = vmatprep.subr.bf16.mxu0 0
    %453 = vmatpush1.bf16.msra.mxu0 %v419
    %454 = vmatprep.subr.bf16.mxu0 0
    %455 = vmatpush1.bf16.msra.mxu0 %v420
    %456 = vmatprep.subr.bf16.mxu0 0
    %457 = vmatpush1.bf16.msra.mxu0 %v421
    %458 = vmatprep.subr.bf16.mxu0 0
    %459 = vmatpush1.bf16.msra.mxu0 %v422
    %460 = vmatprep.subr.bf16.mxu0 0
    %461 = vmatpush1.bf16.msra.mxu0 %v423
    %462 = vmatprep.subr.bf16.mxu0 0
    %463 = vmatpush1.bf16.msra.mxu0 %v424
    %464 = vmatprep.subr.bf16.mxu0 0
    %465 = vmatpush1.bf16.msra.mxu0 %v425
    %466 = vmatprep.subr.bf16.mxu0 0
    %467 = vmatpush1.bf16.msra.mxu0 %v426
    %468 = vmatprep.subr.bf16.mxu0 0
    %469 = vmatpush1.bf16.msra.mxu0 %v427
    %470 = vmatprep.subr.bf16.mxu0 0
    %471 = vmatpush1.bf16.msra.mxu0 %v428
    %472 = vmatprep.subr.bf16.mxu0 0
    %473 = vmatpush1.bf16.msra.mxu0 %v429
    %474 = vmatprep.subr.bf16.mxu0 0
    %475 = vmatpush1.bf16.msra.mxu0 %v430
    %476 = vmatprep.subr.bf16.mxu0 0
    %477 = vmatpush1.bf16.msra.mxu0 %v431
    %478 = vmatprep.subr.bf16.mxu0 0
    %479 = vmatpush1.bf16.msra.mxu0 %v432
    %480 = vmatprep.subr.bf16.mxu0 0
    %481 = vmatpush1.bf16.msra.mxu0 %v433
    %482 = vmatprep.mubr.bf16.mxu0 %v138
    %483 = vmatmul.mubr.bf16.gmra.mrb[0].mxu0 %v137
    %v484 = vpop.f32.mrb[0].mxu0
    %v485 = vadd.f32 %v352, %v484
    %v486 = vpop.f32.mrb[0].mxu0
    %v487 = vpop.f32.mrb[0].mxu0
    %v488 = vpop.f32.mrb[0].mxu0
    %489 = vdwg.mxu0
    %v490 = vmax.f32 %v485, 0.0
    %v491 = vpack.c.bf16 %v314, %v314
    %v492 = vld [vmem:[#allocation10] sm:$0xf]
    %v493 = vld [vmem:[#allocation10 + $0x4] sm:$0xf]
    %v494 = vld [vmem:[#allocation10 + $0x8] sm:$0xf]
    %v495 = vld [vmem:[#allocation10 + $0xc] sm:$0xf]
    %v496 = vld [vmem:[#allocation10 + $0x10] sm:$0xf]
    %v497 = vld [vmem:[#allocation10 + $0x14] sm:$0xf]
    %v498 = vld [vmem:[#allocation10 + $0x18] sm:$0xf]
    %v499 = vld [vmem:[#allocation10 + $0x1c] sm:$0xf]
    %v500 = vld [vmem:[#allocation10 + $0x20] sm:$0xf]
    %v501 = vld [vmem:[#allocation10 + $0x24] sm:$0xf]
    %v502 = vld [vmem:[#allocation10 + $0x28] sm:$0xf]
    %v503 = vld [vmem:[#allocation10 + $0x2c] sm:$0xf]
    %v504 = vld [vmem:[#allocation10 + $0x30] sm:$0xf]
    %v505 = vld [vmem:[#allocation10 + $0x34] sm:$0xf]
    %v506 = vld [vmem:[#allocation10 + $0x38] sm:$0xf]
    %v507 = vld [vmem:[#allocation10 + $0x3c] sm:$0xf]
    %v508 = vpack.c.bf16 %v490, %v490
    %v509 = vld [vmem:[#allocation11] sm:$0xf]
    %v510 = vld [vmem:[#allocation11 + $0x4] sm:$0xf]
    %v511 = vld [vmem:[#allocation11 + $0x8] sm:$0xf]
    %v512 = vld [vmem:[#allocation11 + $0xc] sm:$0xf]
    %v513 = vld [vmem:[#allocation11 + $0x10] sm:$0xf]
    %v514 = vld [vmem:[#allocation11 + $0x14] sm:$0xf]
    %v515 = vld [vmem:[#allocation11 + $0x18] sm:$0xf]
    %v516 = vld [vmem:[#allocation11 + $0x1c] sm:$0xf]
    %v517 = vld [vmem:[#allocation11 + $0x20] sm:$0xf]
    %v518 = vld [vmem:[#allocation11 + $0x24] sm:$0xf]
    %v519 = vld [vmem:[#allocation11 + $0x28] sm:$0xf]
    %v520 = vld [vmem:[#allocation11 + $0x2c] sm:$0xf]
    %v521 = vld [vmem:[#allocation11 + $0x30] sm:$0xf]
    %v522 = vld [vmem:[#allocation11 + $0x34] sm:$0xf]
    %v523 = vld [vmem:[#allocation11 + $0x38] sm:$0xf]
    %v524 = vld [vmem:[#allocation11 + $0x3c] sm:$0xf]
    %v541 = vunpack.c.l.b16 %v509
    %v542 = vunpack.c.l.b16 %v510
    %v543 = vunpack.c.l.b16 %v511
    %v544 = vunpack.c.l.b16 %v512
    %v545 = vunpack.c.l.b16 %v513
    %v546 = vunpack.c.l.b16 %v514
    %v547 = vunpack.c.l.b16 %v515
    %v548 = vunpack.c.l.b16 %v516
    %v549 = vunpack.c.l.b16 %v517
    %v550 = vunpack.c.l.b16 %v518
    %v551 = vunpack.c.l.b16 %v519
    %v552 = vunpack.c.l.b16 %v520
    %v553 = vunpack.c.l.b16 %v521
    %v554 = vunpack.c.l.b16 %v522
    %v555 = vunpack.c.l.b16 %v523
    %v556 = vunpack.c.l.b16 %v524
    %v557 = vpack.c.b16 %v542, %v541
    %v558 = vpack.c.b16 %v544, %v543
    %v559 = vpack.c.b16 %v546, %v545
    %v560 = vpack.c.b16 %v548, %v547
    %v561 = vpack.c.b16 %v550, %v549
    %v562 = vpack.c.b16 %v552, %v551
    %v563 = vpack.c.b16 %v554, %v553
    %v564 = vpack.c.b16 %v556, %v555
    %573 = vmatprep.subr.bf16.mxu0 0
    %574 = vmatpush1.bf16.msra.mxu0 %v557
    %575 = vmatprep.subr.bf16.mxu0 0
    %576 = vmatpush1.bf16.msra.mxu0 %v558
    %577 = vmatprep.subr.bf16.mxu0 0
    %578 = vmatpush1.bf16.msra.mxu0 %v559
    %579 = vmatprep.subr.bf16.mxu0 0
    %580 = vmatpush1.bf16.msra.mxu0 %v560
    %581 = vmatprep.subr.bf16.mxu0 0
    %582 = vmatpush1.bf16.msra.mxu0 %v561
    %583 = vmatprep.subr.bf16.mxu0 0
    %584 = vmatpush1.bf16.msra.mxu0 %v562
    %585 = vmatprep.subr.bf16.mxu0 0
    %586 = vmatpush1.bf16.msra.mxu0 %v563
    %587 = vmatprep.subr.bf16.mxu0 0
    %588 = vmatpush1.bf16.msra.mxu0 %v564
    %589 = vmatprep.subr.bf16.mxu0 0
    %590 = vmatpush1.bf16.msra.mxu0 0
    %591 = vmatprep.subr.bf16.mxu0 0
    %592 = vmatpush1.bf16.msra.mxu0 0
    %593 = vmatprep.subr.bf16.mxu0 0
    %594 = vmatpush1.bf16.msra.mxu0 0
    %595 = vmatprep.subr.bf16.mxu0 0
    %596 = vmatpush1.bf16.msra.mxu0 0
    %597 = vmatprep.subr.bf16.mxu0 0
    %598 = vmatpush1.bf16.msra.mxu0 0
    %599 = vmatprep.subr.bf16.mxu0 0
    %600 = vmatpush1.bf16.msra.mxu0 0
    %601 = vmatprep.subr.bf16.mxu0 0
    %602 = vmatpush1.bf16.msra.mxu0 0
    %603 = vmatprep.subr.bf16.mxu0 0
    %604 = vmatpush1.bf16.msra.mxu0 0
    %605 = vmatprep.mubr.bf16.mxu0 0
    %606 = vmatmul.mubr.bf16.gmra.mrb[0].mxu0 %v508
    %v607 = vpop.f32.mrb[0].mxu0
    %v608 = vadd.f32 0.0, %v607
    %v609 = vpop.f32.mrb[0].mxu0
    %v610 = vpop.f32.mrb[0].mxu0
    %v611 = vpop.f32.mrb[0].mxu0
    %612 = vdwg.mxu0
    %v629 = vunpack.c.l.b16 %v492
    %v630 = vunpack.c.l.b16 %v493
    %v631 = vunpack.c.l.b16 %v494
    %v632 = vunpack.c.l.b16 %v495
    %v633 = vunpack.c.l.b16 %v496
    %v634 = vunpack.c.l.b16 %v497
    %v635 = vunpack.c.l.b16 %v498
    %v636 = vunpack.c.l.b16 %v499
    %v637 = vunpack.c.l.b16 %v500
    %v638 = vunpack.c.l.b16 %v501
    %v639 = vunpack.c.l.b16 %v502
    %v640 = vunpack.c.l.b16 %v503
    %v641 = vunpack.c.l.b16 %v504
    %v642 = vunpack.c.l.b16 %v505
    %v643 = vunpack.c.l.b16 %v506
    %v644 = vunpack.c.l.b16 %v507
    %v645 = vpack.c.b16 %v630, %v629
    %v646 = vpack.c.b16 %v632, %v631
    %v647 = vpack.c.b16 %v634, %v633
    %v648 = vpack.c.b16 %v636, %v635
    %v649 = vpack.c.b16 %v638, %v637
    %v650 = vpack.c.b16 %v640, %v639
    %v651 = vpack.c.b16 %v642, %v641
    %v652 = vpack.c.b16 %v644, %v643
    %661 = vmatprep.subr.bf16.mxu0 0
    %662 = vmatpush1.bf16.msra.mxu0 %v645
    %663 = vmatprep.subr.bf16.mxu0 0
    %664 = vmatpush1.bf16.msra.mxu0 %v646
    %665 = vmatprep.subr.bf16.mxu0 0
    %666 = vmatpush1.bf16.msra.mxu0 %v647
    %667 = vmatprep.subr.bf16.mxu0 0
    %668 = vmatpush1.bf16.msra.mxu0 %v648
    %669 = vmatprep.subr.bf16.mxu0 0
    %670 = vmatpush1.bf16.msra.mxu0 %v649
    %671 = vmatprep.subr.bf16.mxu0 0
    %672 = vmatpush1.bf16.msra.mxu0 %v650
    %673 = vmatprep.subr.bf16.mxu0 0
    %674 = vmatpush1.bf16.msra.mxu0 %v651
    %675 = vmatprep.subr.bf16.mxu0 0
    %676 = vmatpush1.bf16.msra.mxu0 %v652
    %677 = vmatprep.subr.bf16.mxu0 0
    %678 = vmatpush1.bf16.msra.mxu0 0
    %679 = vmatprep.subr.bf16.mxu0 0
    %680 = vmatpush1.bf16.msra.mxu0 0
    %681 = vmatprep.subr.bf16.mxu0 0
    %682 = vmatpush1.bf16.msra.mxu0 0
    %683 = vmatprep.subr.bf16.mxu0 0
    %684 = vmatpush1.bf16.msra.mxu0 0
    %685 = vmatprep.subr.bf16.mxu0 0
    %686 = vmatpush1.bf16.msra.mxu0 0
    %687 = vmatprep.subr.bf16.mxu0 0
    %688 = vmatpush1.bf16.msra.mxu0 0
    %689 = vmatprep.subr.bf16.mxu0 0
    %690 = vmatpush1.bf16.msra.mxu0 0
    %691 = vmatprep.subr.bf16.mxu0 0
    %692 = vmatpush1.bf16.msra.mxu0 0
    %693 = vmatprep.mubr.bf16.mxu0 0
    %694 = vmatmul.mubr.bf16.gmra.mrb[0].mxu0 %v491
    %v695 = vpop.f32.mrb[0].mxu0
    %v696 = vadd.f32 %v608, %v695
    %v697 = vpop.f32.mrb[0].mxu0
    %v698 = vpop.f32.mrb[0].mxu0
    %v699 = vpop.f32.mrb[0].mxu0
    %700 = vdwg.mxu0
    %v701 = vld [vmem:[%s8] sm:$0x1]
    %v703 = vlaneseq
    %v704 = vshrl.u32 %v703, 7
    %v705 = vsub.s32 0, %v704
    %v706 = vrot.slane %v701, %v705
    %v708 = vadd.f32 %v696, %v706
    %v709 = vmax.f32 %v708, 0.0
    %v710 = vpack.c.bf16 %v709, %v709
    %v711 = vld [vmem:[#allocation13] sm:$0xf]
    %v712 = vld [vmem:[#allocation13 + $0x4] sm:$0xf]
    %v713 = vld [vmem:[#allocation13 + $0x8] sm:$0xf]
    %v714 = vld [vmem:[#allocation13 + $0xc] sm:$0xf]
    %v715 = vld [vmem:[#allocation13 + $0x10] sm:$0xf]
    %v716 = vld [vmem:[#allocation13 + $0x14] sm:$0xf]
    %v717 = vld [vmem:[#allocation13 + $0x18] sm:$0xf]
    %v718 = vld [vmem:[#allocation13 + $0x1c] sm:$0xf]
    %v719 = vld [vmem:[#allocation13 + $0x20] sm:$0xf]
    %v720 = vld [vmem:[#allocation13 + $0x24] sm:$0xf]
    %v721 = vld [vmem:[#allocation13 + $0x28] sm:$0xf]
    %v722 = vld [vmem:[#allocation13 + $0x2c] sm:$0xf]
    %v723 = vld [vmem:[#allocation13 + $0x30] sm:$0xf]
    %v724 = vld [vmem:[#allocation13 + $0x34] sm:$0xf]
    %v725 = vld [vmem:[#allocation13 + $0x38] sm:$0xf]
    %v726 = vld [vmem:[#allocation13 + $0x3c] sm:$0xf]
    %v727 = vld [vmem:[%s10] sm:$0x1]
    %v729 = vlaneseq
    %v730 = vshrl.u32 %v729, 7
    %v731 = vsub.s32 0, %v730
    %v732 = vrot.slane %v727, %v731
    %v750 = vunpack.c.l.b16 %v711
    %v751 = vunpack.c.l.b16 %v712
    %v752 = vunpack.c.l.b16 %v713
    %v753 = vunpack.c.l.b16 %v714
    %v754 = vunpack.c.l.b16 %v715
    %v755 = vunpack.c.l.b16 %v716
    %v756 = vunpack.c.l.b16 %v717
    %v757 = vunpack.c.l.b16 %v718
    %v758 = vunpack.c.l.b16 %v719
    %v759 = vunpack.c.l.b16 %v720
    %v760 = vunpack.c.l.b16 %v721
    %v761 = vunpack.c.l.b16 %v722
    %v762 = vunpack.c.l.b16 %v723
    %v763 = vunpack.c.l.b16 %v724
    %v764 = vunpack.c.l.b16 %v725
    %v765 = vunpack.c.l.b16 %v726
    %v766 = vpack.c.b16 %v751, %v750
    %v767 = vpack.c.b16 %v753, %v752
    %v768 = vpack.c.b16 %v755, %v754
    %v769 = vpack.c.b16 %v757, %v756
    %v770 = vpack.c.b16 %v759, %v758
    %v771 = vpack.c.b16 %v761, %v760
    %v772 = vpack.c.b16 %v763, %v762
    %v773 = vpack.c.b16 %v765, %v764
    %782 = vmatprep.subr.bf16.mxu0 0
    %783 = vmatpush1.bf16.msra.mxu0 %v766
    %784 = vmatprep.subr.bf16.mxu0 0
    %785 = vmatpush1.bf16.msra.mxu0 %v767
    %786 = vmatprep.subr.bf16.mxu0 0
    %787 = vmatpush1.bf16.msra.mxu0 %v768
    %788 = vmatprep.subr.bf16.mxu0 0
    %789 = vmatpush1.bf16.msra.mxu0 %v769
    %790 = vmatprep.subr.bf16.mxu0 0
    %791 = vmatpush1.bf16.msra.mxu0 %v770
    %792 = vmatprep.subr.bf16.mxu0 0
    %793 = vmatpush1.bf16.msra.mxu0 %v771
    %794 = vmatprep.subr.bf16.mxu0 0
    %795 = vmatpush1.bf16.msra.mxu0 %v772
    %796 = vmatprep.subr.bf16.mxu0 0
    %797 = vmatpush1.bf16.msra.mxu0 %v773
    %798 = vmatprep.subr.bf16.mxu0 0
    %799 = vmatpush1.bf16.msra.mxu0 0
    %800 = vmatprep.subr.bf16.mxu0 0
    %801 = vmatpush1.bf16.msra.mxu0 0
    %802 = vmatprep.subr.bf16.mxu0 0
    %803 = vmatpush1.bf16.msra.mxu0 0
    %804 = vmatprep.subr.bf16.mxu0 0
    %805 = vmatpush1.bf16.msra.mxu0 0
    %806 = vmatprep.subr.bf16.mxu0 0
    %807 = vmatpush1.bf16.msra.mxu0 0
    %808 = vmatprep.subr.bf16.mxu0 0
    %809 = vmatpush1.bf16.msra.mxu0 0
    %810 = vmatprep.subr.bf16.mxu0 0
    %811 = vmatpush1.bf16.msra.mxu0 0
    %812 = vmatprep.subr.bf16.mxu0 0
    %813 = vmatpush1.bf16.msra.mxu0 0
    %814 = vmatprep.mubr.bf16.mxu0 0
    %815 = vmatmul.mubr.bf16.gmra.mrb[0].mxu0 %v710
    %v816 = vpop.f32.mrb[0].mxu0
    %v817 = vadd.f32 %v732, %v816
    %v818 = vpop.f32.mrb[0].mxu0
    %v819 = vpop.f32.mrb[0].mxu0
    %v820 = vpop.f32.mrb[0].mxu0
    %821 = vdwg.mxu0
    %822 = vst [vmem:[#allocation14] sm:$0xff] %v817
    // Predicated region
    $region74: #{tpu_custom_call.1} parent=1 // pred_check
      _
    $region75: #{tpu_custom_call.1} parent=1 // pred_check_branch
      %824 = sbr.rel (0) target = $region77
    $region76: #{tpu_custom_call.1} parent=1 // pred_region
      %s826 = ssub.s32 128, 128
      %827 = vsyncadd [#allocation4], %s826
      %s829 = sshll.u32 [#allocation14], 4
      %s830 = int_to_ptr.vmem [resolvable:$true] %s829
      %832 = dma.vmem_to_hbm [thread:$0]  %s830, 128, %s11, [#allocation4]
    $region77: #{tpu_custom_call.1} parent=1 // pred_fallthru
      _
    // Predicated region
    $region78: #{tpu_custom_call.1} parent=1 // pred_check
      _
    $region79: #{tpu_custom_call.1} parent=1 // pred_check_branch
      %834 = sbr.rel (0) target = $region81
    $region80: #{tpu_custom_call.1} parent=1 // pred_region
      %835 = dma.done [#allocation4], 128
    $region81: #{tpu_custom_call.1} parent=1 // pred_fallthru
      _
    %836 = vsyncpa [#allocation3], 1
    %837 = vsyncpa [#allocation6], 1
    %838 = vsyncpa [#allocation9], 1
    %839 = vsyncpa [#allocation12], 1
    %840 = vsyncpa [#allocation4], 1

</llo_original>
